<compile_context>
chip_gen: v5e
topology: v5e:2x2
jax: 0.10.0
libtpu: 0.0.40
codegen_flags: <defaults>
</compile_context>

<pallas_src>
import functools

import jax
import jax.numpy as jnp
from jax.experimental import pallas as pl
from jax.experimental.pallas import tpu as pltpu


def critic_mlp_kernel(obs_ref, act_ref, w1o_ref, w1a_ref, b1_ref,
                      w2_ref, b2_ref, w3_ref, b3_ref, o_ref):
    # Layer 1 — concat fused as a split matmul: x@W1 == obs@W1o + act@W1a.
    h1 = (jnp.dot(obs_ref[...], w1o_ref[...], preferred_element_type=jnp.float32)
          + jnp.dot(act_ref[...], w1a_ref[...], preferred_element_type=jnp.float32)
          + b1_ref[...])
    h1 = jnp.maximum(h1, 0.0)                                      # ReLU

    # Layer 2 — (tb, H) @ (H, H) on the MXU, f32 accumulation.
    h2 = (jnp.dot(h1.astype(w2_ref.dtype), w2_ref[...],
                  preferred_element_type=jnp.float32)
          + b2_ref[...])
    h2 = jnp.maximum(h2, 0.0)                                      # ReLU

    # Layer 3 — N=1 matmul replaced by broadcast-mul + lane reduce (VPU/XLU).
    w3_row = w3_ref[...].astype(jnp.float32)                       # (1, H)
    q = jnp.sum(h2 * w3_row, axis=-1, keepdims=True) + b3_ref[0, 0]
    o_ref[...] = q.astype(o_ref.dtype)                             # (tb, 1)


def _round_up(x, m):
    return ((x + m - 1) // m) * m


@functools.partial(jax.jit, static_argnames=("tb",))
def critic_forward(obs, action, params, tb=512):
    """Q(s, a) via one fused Pallas MLP kernel. Returns (B, 1)."""
    w1, b1, w2, b2, w3, b3 = params
    B, obs_dim = obs.shape
    action_dim = action.shape[-1]
    H = w1.shape[1]

    # Host-side (tiny, one-off) weight reshapes so the concat is fused away.
    w1_obs = w1[:obs_dim]                       # (obs_dim, H)
    w1_act = w1[obs_dim:]                       # (action_dim, H)
    w3_row = jnp.reshape(w3, (1, H))            # (1, H) for the lane reduction
    b3_s = jnp.reshape(b3, (1, 1)).astype(jnp.float32)   # SMEM scalar

    # Batch tiling: big, 128-aligned tiles; pad ragged batches instead of
    # asserting divisibility.
    if B <= tb:
        tb_eff = _round_up(B, 8)
        Bp = tb_eff
    else:
        tb_eff = tb
        Bp = _round_up(B, tb_eff)
    if Bp != B:
        pad = Bp - B
        obs = jnp.pad(obs, ((0, pad), (0, 0)))
        action = jnp.pad(action, ((0, pad), (0, 0)))

    out = pl.pallas_call(
        critic_mlp_kernel,
        out_shape=jax.ShapeDtypeStruct((Bp, 1), obs.dtype),
        grid_spec=pltpu.PrefetchScalarGridSpec(
            num_scalar_prefetch=0,
            grid=(Bp // tb_eff,),
            in_specs=[
                pl.BlockSpec((tb_eff, obs_dim), lambda i: (i, 0)),     # obs tile
                pl.BlockSpec((tb_eff, action_dim), lambda i: (i, 0)),  # action tile
                pl.BlockSpec((obs_dim, H), lambda i: (0, 0)),          # W1[:obs]
                pl.BlockSpec((action_dim, H), lambda i: (0, 0)),       # W1[obs:]
                pl.BlockSpec((1, H), lambda i: (0, 0)),                # b1
                pl.BlockSpec((H, H), lambda i: (0, 0)),                # W2
                pl.BlockSpec((1, H), lambda i: (0, 0)),                # b2
                pl.BlockSpec((1, H), lambda i: (0, 0)),                # W3 row
                pl.BlockSpec(memory_space=pltpu.MemorySpace.SMEM),     # b3 scalar
            ],
            out_specs=pl.BlockSpec((tb_eff, 1), lambda i: (i, 0)),
        ),
        compiler_params=pltpu.CompilerParams(
            dimension_semantics=("parallel",)),
    )(obs, action, w1_obs, w1_act, b1, w2, b2, w3_row, b3_s)

    return out[:B]


def init_critic_params(key, obs_dim, action_dim, hidden_dim=128,
                       dtype=jnp.float32):
    """Deterministic init mirroring nn.Linear default (U(-1/sqrt(fan_in), +))."""
    d_in = obs_dim + action_dim
    ks = jax.random.split(key, 6)

    def linear(kw, kb, fan_in, fan_out):
        bound = 1.0 / jnp.sqrt(jnp.asarray(fan_in, dtype))
        w = jax.random.uniform(kw, (fan_in, fan_out), dtype, -bound, bound)
        b = jax.random.uniform(kb, (1, fan_out), dtype, -bound, bound)
        return w, b

    w1, b1 = linear(ks[0], ks[1], d_in, hidden_dim)
    w2, b2 = linear(ks[2], ks[3], hidden_dim, hidden_dim)
    w3, b3 = linear(ks[4], ks[5], hidden_dim, 1)
    return (w1, b1, w2, b2, w3, b3)


def critic_reference(obs, action, params):
    """Pure-JAX reference for correctness checking."""
    w1, b1, w2, b2, w3, b3 = params
    x = jnp.concatenate([obs, action], axis=-1)
    h1 = jnp.maximum(x @ w1 + b1, 0.0)
    h2 = jnp.maximum(h1 @ w2 + b2, 0.0)
    return h2 @ w3 + b3


if __name__ == "__main__":
    obs_dim, action_dim, hidden_dim = 8, 4, 128

    key = jax.random.PRNGKey(0)
    k_obs, k_act, k_par = jax.random.split(key, 3)
    params = init_critic_params(k_par, obs_dim, action_dim, hidden_dim)

    # Case 1: batch a multiple of the tile (multi-step grid, tb=512).
    B1 = 1024
    obs1 = jax.random.normal(k_obs, (B1, obs_dim), jnp.float32)
    act1 = jax.random.normal(k_act, (B1, action_dim), jnp.float32)
    q1 = jax.block_until_ready(critic_forward(obs1, act1, params, tb=512))
    ref1 = critic_reference(obs1, act1, params)
    assert q1.shape == (B1, 1)
    assert jnp.allclose(q1, ref1, atol=1e-4, rtol=1e-4)

    # Case 2: small ragged batch (exercises the padding path).
    B2 = 37
    obs2 = jax.random.normal(k_obs, (B2, obs_dim), jnp.float32)
    act2 = jax.random.normal(k_act, (B2, action_dim), jnp.float32)
    q2 = jax.block_until_ready(critic_forward(obs2, act2, params, tb=512))
    ref2 = critic_reference(obs2, act2, params)
    assert q2.shape == (B2, 1)
    assert jnp.allclose(q2, ref2, atol=1e-4, rtol=1e-4)

    print("KERNEL_OK")
</pallas_src>

<mosaic_0001>
module attributes {stable_mosaic.version = 11 : i64} {
  func.func @critic_mlp_kernel(%arg0: i32, %arg1: memref<512x8xf32, #tpu.memory_space<vmem>>, %arg2: memref<512x4xf32, #tpu.memory_space<vmem>>, %arg3: memref<8x128xf32, #tpu.memory_space<vmem>>, %arg4: memref<4x128xf32, #tpu.memory_space<vmem>>, %arg5: memref<1x128xf32, #tpu.memory_space<vmem>>, %arg6: memref<128x128xf32, #tpu.memory_space<vmem>>, %arg7: memref<1x128xf32, #tpu.memory_space<vmem>>, %arg8: memref<1x128xf32, #tpu.memory_space<vmem>>, %arg9: memref<1x1xf32, #tpu.memory_space<smem>>, %arg10: memref<512x1xf32, #tpu.memory_space<vmem>>) attributes {dimension_semantics = [#tpu.dimension_semantics<parallel>], iteration_bounds = array<i64: 2>, scalar_prefetch = 0 : i64, scratch_operands = 0 : i64, tpu.core_type = #tpu.core_type<tc>, window_params = [{transform_indices = @transform_0, window_bounds = array<i64: 512, 8>}, {transform_indices = @transform_1, window_bounds = array<i64: 512, 4>}, {pipeline_mode = #tpu.pipeline_mode<synchronous>, transform_indices = @transform_2, window_bounds = array<i64: 8, 128>}, {pipeline_mode = #tpu.pipeline_mode<synchronous>, transform_indices = @transform_3, window_bounds = array<i64: 4, 128>}, {pipeline_mode = #tpu.pipeline_mode<synchronous>, transform_indices = @transform_4, window_bounds = array<i64: 1, 128>}, {pipeline_mode = #tpu.pipeline_mode<synchronous>, transform_indices = @transform_5, window_bounds = array<i64: 128, 128>}, {pipeline_mode = #tpu.pipeline_mode<synchronous>, transform_indices = @transform_6, window_bounds = array<i64: 1, 128>}, {pipeline_mode = #tpu.pipeline_mode<synchronous>, transform_indices = @transform_7, window_bounds = array<i64: 1, 128>}, {transform_indices = @transform_8, window_bounds = array<i64: 1, 1>}, {transform_indices = @transform_9, window_bounds = array<i64: 512, 1>}]} {
    %c0 = arith.constant 0 : index
    %c0_0 = arith.constant 0 : index
    %0 = vector.load %arg1[%c0, %c0_0] : memref<512x8xf32, #tpu.memory_space<vmem>>, vector<512x8xf32>
    %c0_1 = arith.constant 0 : index
    %c0_2 = arith.constant 0 : index
    %1 = vector.load %arg3[%c0_1, %c0_2] : memref<8x128xf32, #tpu.memory_space<vmem>>, vector<8x128xf32>
    %cst = arith.constant dense<0.000000e+00> : vector<512x128xf32>
    %2 = tpu.matmul %0, %1, %cst {dimension_numbers = #tpu.dot_dimension_numbers<[1], [0], [0], [1], [0, 0, 1, 1], [], []>} : vector<512x8xf32>, vector<8x128xf32>, vector<512x128xf32> -> vector<512x128xf32>
    %c0_3 = arith.constant 0 : index
    %c0_4 = arith.constant 0 : index
    %3 = vector.load %arg2[%c0_3, %c0_4] : memref<512x4xf32, #tpu.memory_space<vmem>>, vector<512x4xf32>
    %c0_5 = arith.constant 0 : index
    %c0_6 = arith.constant 0 : index
    %4 = vector.load %arg4[%c0_5, %c0_6] : memref<4x128xf32, #tpu.memory_space<vmem>>, vector<4x128xf32>
    %cst_7 = arith.constant dense<0.000000e+00> : vector<512x128xf32>
    %5 = tpu.matmul %3, %4, %cst_7 {dimension_numbers = #tpu.dot_dimension_numbers<[1], [0], [0], [1], [0, 0, 1, 1], [], []>} : vector<512x4xf32>, vector<4x128xf32>, vector<512x128xf32> -> vector<512x128xf32>
    %6 = arith.addf %2, %5 : vector<512x128xf32>
    %c0_8 = arith.constant 0 : index
    %c0_9 = arith.constant 0 : index
    %7 = vector.load %arg5[%c0_8, %c0_9] : memref<1x128xf32, #tpu.memory_space<vmem>>, vector<1x128xf32>
    %8 = vector.broadcast %7 : vector<1x128xf32> to vector<512x128xf32>
    %9 = arith.addf %6, %8 : vector<512x128xf32>
    %cst_10 = arith.constant 0.000000e+00 : f32
    %10 = vector.broadcast %cst_10 : f32 to vector<512x128xf32>
    %11 = arith.maximumf %9, %10 : vector<512x128xf32>
    %c0_11 = arith.constant 0 : index
    %c0_12 = arith.constant 0 : index
    %12 = vector.load %arg6[%c0_11, %c0_12] : memref<128x128xf32, #tpu.memory_space<vmem>>, vector<128x128xf32>
    %cst_13 = arith.constant dense<0.000000e+00> : vector<512x128xf32>
    %13 = tpu.matmul %11, %12, %cst_13 {dimension_numbers = #tpu.dot_dimension_numbers<[1], [0], [0], [1], [0, 0, 1, 1], [], []>} : vector<512x128xf32>, vector<128x128xf32>, vector<512x128xf32> -> vector<512x128xf32>
    %c0_14 = arith.constant 0 : index
    %c0_15 = arith.constant 0 : index
    %14 = vector.load %arg7[%c0_14, %c0_15] : memref<1x128xf32, #tpu.memory_space<vmem>>, vector<1x128xf32>
    %15 = vector.broadcast %14 : vector<1x128xf32> to vector<512x128xf32>
    %16 = arith.addf %13, %15 : vector<512x128xf32>
    %cst_16 = arith.constant 0.000000e+00 : f32
    %17 = vector.broadcast %cst_16 : f32 to vector<512x128xf32>
    %18 = arith.maximumf %16, %17 : vector<512x128xf32>
    %c0_17 = arith.constant 0 : index
    %c0_18 = arith.constant 0 : index
    %19 = vector.load %arg8[%c0_17, %c0_18] : memref<1x128xf32, #tpu.memory_space<vmem>>, vector<1x128xf32>
    %20 = vector.broadcast %19 : vector<1x128xf32> to vector<512x128xf32>
    %21 = arith.mulf %18, %20 : vector<512x128xf32>
    %cst_19 = arith.constant dense<0.000000e+00> : vector<512xf32>
    %22 = vector.multi_reduction <add>, %21, %cst_19 [1] : vector<512x128xf32> to vector<512xf32>
    %23 = vector.shape_cast %22 : vector<512xf32> to vector<512x1xf32>
    %c0_20 = arith.constant 0 : index
    %c0_21 = arith.constant 0 : index
    %24 = memref.load %arg9[%c0_20, %c0_21] : memref<1x1xf32, #tpu.memory_space<smem>>
    %25 = vector.broadcast %24 : f32 to vector<512x1xf32>
    %26 = arith.addf %23, %25 : vector<512x1xf32>
    %c0_22 = arith.constant 0 : index
    %c0_23 = arith.constant 0 : index
    %27 = vector.load %arg10[%c0_22, %c0_23] : memref<512x1xf32, #tpu.memory_space<vmem>>, vector<512x1xf32>
    tpu.vector_store %arg10[%c0_22, %c0_23], %26 {strides = array<i32>} : memref<512x1xf32, #tpu.memory_space<vmem>>, vector<512x1xf32>,
    return
  }
  func.func @transform_0(%arg0: i32) -> (i32, i32) {
    %c0_i32 = arith.constant 0 : i32
    %c0_i32_0 = arith.constant 0 : i32
    return %arg0, %c0_i32 : i32, i32
  }
  func.func @transform_1(%arg0: i32) -> (i32, i32) {
    %c0_i32 = arith.constant 0 : i32
    %c0_i32_0 = arith.constant 0 : i32
    return %arg0, %c0_i32 : i32, i32
  }
  func.func @transform_2(%arg0: i32) -> (i32, i32) {
    %c0_i32 = arith.constant 0 : i32
    %c0_i32_0 = arith.constant 0 : i32
    %c0_i32_1 = arith.constant 0 : i32
    return %c0_i32, %c0_i32_0 : i32, i32
  }
  func.func @transform_3(%arg0: i32) -> (i32, i32) {
    %c0_i32 = arith.constant 0 : i32
    %c0_i32_0 = arith.constant 0 : i32
    %c0_i32_1 = arith.constant 0 : i32
    return %c0_i32, %c0_i32_0 : i32, i32
  }
  func.func @transform_4(%arg0: i32) -> (i32, i32) {
    %c0_i32 = arith.constant 0 : i32
    %c0_i32_0 = arith.constant 0 : i32
    %c0_i32_1 = arith.constant 0 : i32
    return %c0_i32, %c0_i32_0 : i32, i32
  }
  func.func @transform_5(%arg0: i32) -> (i32, i32) {
    %c0_i32 = arith.constant 0 : i32
    %c0_i32_0 = arith.constant 0 : i32
    %c0_i32_1 = arith.constant 0 : i32
    return %c0_i32, %c0_i32_0 : i32, i32
  }
  func.func @transform_6(%arg0: i32) -> (i32, i32) {
    %c0_i32 = arith.constant 0 : i32
    %c0_i32_0 = arith.constant 0 : i32
    %c0_i32_1 = arith.constant 0 : i32
    return %c0_i32, %c0_i32_0 : i32, i32
  }
  func.func @transform_7(%arg0: i32) -> (i32, i32) {
    %c0_i32 = arith.constant 0 : i32
    %c0_i32_0 = arith.constant 0 : i32
    %c0_i32_1 = arith.constant 0 : i32
    return %c0_i32, %c0_i32_0 : i32, i32
  }
  func.func @transform_8(%arg0: i32) -> (i32, i32) {
    %c0_i32 = arith.constant 0 : i32
    %c0_i32_0 = arith.constant 0 : i32
    %c0_i32_1 = arith.constant 0 : i32
    return %c0_i32, %c0_i32_0 : i32, i32
  }
  func.func @transform_9(%arg0: i32) -> (i32, i32) {
    %c0_i32 = arith.constant 0 : i32
    %c0_i32_0 = arith.constant 0 : i32
    return %arg0, %c0_i32 : i32, i32
  }
}

</mosaic_0001>

<llo_original>
// kernel: critic_forward.1
$region0: #{critic_forward.1}
  #allocation0 [shape = 'u32[]', space=smem, size = 0x4, offset = 0x4, fixed_abs, tag = 'smem constant byte address 0x4 - core index']
  #allocation1 [shape = 'u32[72,128]{1,0:T(1,128)}', space=vmem, size = 0x9000, scoped, tag = 'internal scratch']
  #allocation2 [shape = 'f32[1,1]{1,0:T(1,128)S(6)}', space=smem, size = 0x200, scoped, tag = 'scoped memory for critic_forward.1']
  %s0 = inlined_call_operand.vmem [shape: f32[1024,8], index: 0, kind: input, shape index: {}]
  %s1 = inlined_call_operand.vmem [shape: f32[1024,4], index: 1, kind: input, shape index: {}]
  %s2 = inlined_call_operand.vmem [shape: f32[8,128], index: 2, kind: input, shape index: {}]
  %s3 = inlined_call_operand.vmem [shape: f32[4,128], index: 3, kind: input, shape index: {}]
  %s4 = inlined_call_operand.vmem [shape: f32[1,128], index: 4, kind: input, shape index: {}]
  %s5 = inlined_call_operand.vmem [shape: f32[128,128], index: 5, kind: input, shape index: {}]
  %s6 = inlined_call_operand.vmem [shape: f32[1,128], index: 6, kind: input, shape index: {}]
  %s7 = inlined_call_operand.vmem [shape: f32[1,128], index: 7, kind: input, shape index: {}]
  %s8 = inlined_call_operand.<no memory space> [shape: f32[1,1], index: 8, kind: input, shape index: {}]
  %s9 = inlined_call_operand.vmem [shape: f32[1024,1], index: 9, kind: output, shape index: {}]
  %s10 = sld [smem:[#allocation0]]
  $region69: #{critic_forward.1} parent=0
    _
  %s12 = ssub.s32 1, %s10
  %s13 = scalar_select 0, %s12, %s10
  %14 = sst [smem:[#allocation2]] %s8
  loop: start=0, step=1, limit=4
  $region2: #{critic_forward.1} parent=0 // loop_pre_header
    _
  $region3: #{critic_forward.1} parent=0 // loop_header
    %s16 = sphi 0, %s20
    %p17 = scmp.ge.s32.totalorder %s16, 4
    %s26 = sphi 0, %s28
    %s29 = sphi 0, %s26
    %s30 = sphi 0, %s29
    %s46 = sphi 0, %s30
    %s52 = sphi 0, %s54
    %s55 = sphi 0, %s52
    %s56 = sphi 0, %s55
    %s72 = sphi 0, %s56
    %s76 = sphi 0, %s76
    %s78 = sphi 0, %s76
    %s79 = sphi 0, %s78
    %s93 = sphi 0, %s79
    %s97 = sphi 0, %s97
    %s99 = sphi 0, %s97
    %s100 = sphi 0, %s99
    %s114 = sphi 0, %s100
    %s118 = sphi 0, %s118
    %s120 = sphi 0, %s118
    %s121 = sphi 0, %s120
    %s135 = sphi 0, %s121
    %s139 = sphi 0, %s139
    %s141 = sphi 0, %s139
    %s142 = sphi 0, %s141
    %s156 = sphi 0, %s142
    %s160 = sphi 0, %s160
    %s162 = sphi 0, %s160
    %s163 = sphi 0, %s162
    %s177 = sphi 0, %s163
    %s181 = sphi 0, %s181
    %s183 = sphi 0, %s181
    %s184 = sphi 0, %s183
    %s198 = sphi 0, %s184
    %s202 = sphi 0, %s202
    %s204 = sphi 0, %s202
    %s205 = sphi 0, %s204
    %s219 = sphi 0, %s205
    %s225 = sphi 0, %s227
    %s228 = sphi 0, %s225
    %s229 = sphi 0, %s228
    %s245 = sphi 0, %s229
  $region4: #{critic_forward.1} parent=0 // loop_header_branch
    %19 = sbr.rel (%p17) target = $region8
  $region5: #{critic_forward.1} parent=0 // loop_body
    %s21 = ssub.s32 %s16, 1
    %s22 = ssub.s32 %s16, 2
    %s23 = sadd.s32 %s16, 1
    %s24 = ssub.s32 %s16, %s23
    %p25 = scmp.eq.s32.totalorder %s24, 0
    %s27 = sadd.s32 %s26, 1
    %s28 = scalar_select %p25, %s26, %s27
    %p31 = pneg %p25
    %p32 = scmp.eq.s32.totalorder %s16, 1
    %p33 = por %p31, %p32
    %p34 = scmp.ne.s32.totalorder %s26, %s29
    %p35 = scmp.eq.s32.totalorder %s16, 0
    %p36 = por %p34, %p35
    %p37 = scmp.ne.s32.totalorder %s26, %s29
    %p38 = scmp.eq.s32.totalorder %s21, 1
    %p39 = por %p37, %p38
    %p40 = scmp.ne.s32.totalorder %s29, %s30
    %p41 = scmp.eq.s32.totalorder %s21, 0
    %p42 = por %p40, %p41
    %p43 = scmp.ne.s32.totalorder %s29, %s30
    %p44 = scmp.eq.s32.totalorder %s22, 1
    %p45 = por %p43, %p44
    %p47 = scmp.ne.s32.totalorder %s30, %s46
    %p48 = scmp.eq.s32.totalorder %s22, 0
    %p49 = por %p47, %p48
    %s50 = ssub.s32 %s16, %s23
    %p51 = scmp.eq.s32.totalorder %s50, 0
    %s53 = sadd.s32 %s52, 1
    %s54 = scalar_select %p51, %s52, %s53
    %p57 = pneg %p51
    %p58 = scmp.eq.s32.totalorder %s16, 1
    %p59 = por %p57, %p58
    %p60 = scmp.ne.s32.totalorder %s52, %s55
    %p61 = scmp.eq.s32.totalorder %s16, 0
    %p62 = por %p60, %p61
    %p63 = scmp.ne.s32.totalorder %s52, %s55
    %p64 = scmp.eq.s32.totalorder %s21, 1
    %p65 = por %p63, %p64
    %p66 = scmp.ne.s32.totalorder %s55, %s56
    %p67 = scmp.eq.s32.totalorder %s21, 0
    %p68 = por %p66, %p67
    %p69 = scmp.ne.s32.totalorder %s55, %s56
    %p70 = scmp.eq.s32.totalorder %s22, 1
    %p71 = por %p69, %p70
    %p73 = scmp.ne.s32.totalorder %s56, %s72
    %p74 = scmp.eq.s32.totalorder %s22, 0
    %p75 = por %p73, %p74
    %s77 = sadd.s32 %s76, 1
    %p80 = scmp.eq.s32.totalorder %s16, 1
    %p81 = scmp.ne.s32.totalorder %s76, %s78
    %p82 = scmp.eq.s32.totalorder %s16, 0
    %p83 = por %p81, %p82
    %p84 = scmp.ne.s32.totalorder %s76, %s78
    %p85 = scmp.eq.s32.totalorder %s21, 1
    %p86 = por %p84, %p85
    %p87 = scmp.ne.s32.totalorder %s78, %s79
    %p88 = scmp.eq.s32.totalorder %s21, 0
    %p89 = por %p87, %p88
    %p90 = scmp.ne.s32.totalorder %s78, %s79
    %p91 = scmp.eq.s32.totalorder %s22, 1
    %p92 = por %p90, %p91
    %p94 = scmp.ne.s32.totalorder %s79, %s93
    %p95 = scmp.eq.s32.totalorder %s22, 0
    %p96 = por %p94, %p95
    %s98 = sadd.s32 %s97, 1
    %p101 = scmp.eq.s32.totalorder %s16, 1
    %p102 = scmp.ne.s32.totalorder %s97, %s99
    %p103 = scmp.eq.s32.totalorder %s16, 0
    %p104 = por %p102, %p103
    %p105 = scmp.ne.s32.totalorder %s97, %s99
    %p106 = scmp.eq.s32.totalorder %s21, 1
    %p107 = por %p105, %p106
    %p108 = scmp.ne.s32.totalorder %s99, %s100
    %p109 = scmp.eq.s32.totalorder %s21, 0
    %p110 = por %p108, %p109
    %p111 = scmp.ne.s32.totalorder %s99, %s100
    %p112 = scmp.eq.s32.totalorder %s22, 1
    %p113 = por %p111, %p112
    %p115 = scmp.ne.s32.totalorder %s100, %s114
    %p116 = scmp.eq.s32.totalorder %s22, 0
    %p117 = por %p115, %p116
    %s119 = sadd.s32 %s118, 1
    %p122 = scmp.eq.s32.totalorder %s16, 1
    %p123 = scmp.ne.s32.totalorder %s118, %s120
    %p124 = scmp.eq.s32.totalorder %s16, 0
    %p125 = por %p123, %p124
    %p126 = scmp.ne.s32.totalorder %s118, %s120
    %p127 = scmp.eq.s32.totalorder %s21, 1
    %p128 = por %p126, %p127
    %p129 = scmp.ne.s32.totalorder %s120, %s121
    %p130 = scmp.eq.s32.totalorder %s21, 0
    %p131 = por %p129, %p130
    %p132 = scmp.ne.s32.totalorder %s120, %s121
    %p133 = scmp.eq.s32.totalorder %s22, 1
    %p134 = por %p132, %p133
    %p136 = scmp.ne.s32.totalorder %s121, %s135
    %p137 = scmp.eq.s32.totalorder %s22, 0
    %p138 = por %p136, %p137
    %s140 = sadd.s32 %s139, 1
    %p143 = scmp.eq.s32.totalorder %s16, 1
    %p144 = scmp.ne.s32.totalorder %s139, %s141
    %p145 = scmp.eq.s32.totalorder %s16, 0
    %p146 = por %p144, %p145
    %p147 = scmp.ne.s32.totalorder %s139, %s141
    %p148 = scmp.eq.s32.totalorder %s21, 1
    %p149 = por %p147, %p148
    %p150 = scmp.ne.s32.totalorder %s141, %s142
    %p151 = scmp.eq.s32.totalorder %s21, 0
    %p152 = por %p150, %p151
    %p153 = scmp.ne.s32.totalorder %s141, %s142
    %p154 = scmp.eq.s32.totalorder %s22, 1
    %p155 = por %p153, %p154
    %p157 = scmp.ne.s32.totalorder %s142, %s156
    %p158 = scmp.eq.s32.totalorder %s22, 0
    %p159 = por %p157, %p158
    %s161 = sadd.s32 %s160, 1
    %p164 = scmp.eq.s32.totalorder %s16, 1
    %p165 = scmp.ne.s32.totalorder %s160, %s162
    %p166 = scmp.eq.s32.totalorder %s16, 0
    %p167 = por %p165, %p166
    %p168 = scmp.ne.s32.totalorder %s160, %s162
    %p169 = scmp.eq.s32.totalorder %s21, 1
    %p170 = por %p168, %p169
    %p171 = scmp.ne.s32.totalorder %s162, %s163
    %p172 = scmp.eq.s32.totalorder %s21, 0
    %p173 = por %p171, %p172
    %p174 = scmp.ne.s32.totalorder %s162, %s163
    %p175 = scmp.eq.s32.totalorder %s22, 1
    %p176 = por %p174, %p175
    %p178 = scmp.ne.s32.totalorder %s163, %s177
    %p179 = scmp.eq.s32.totalorder %s22, 0
    %p180 = por %p178, %p179
    %s182 = sadd.s32 %s181, 1
    %p185 = scmp.eq.s32.totalorder %s16, 1
    %p186 = scmp.ne.s32.totalorder %s181, %s183
    %p187 = scmp.eq.s32.totalorder %s16, 0
    %p188 = por %p186, %p187
    %p189 = scmp.ne.s32.totalorder %s181, %s183
    %p190 = scmp.eq.s32.totalorder %s21, 1
    %p191 = por %p189, %p190
    %p192 = scmp.ne.s32.totalorder %s183, %s184
    %p193 = scmp.eq.s32.totalorder %s21, 0
    %p194 = por %p192, %p193
    %p195 = scmp.ne.s32.totalorder %s183, %s184
    %p196 = scmp.eq.s32.totalorder %s22, 1
    %p197 = por %p195, %p196
    %p199 = scmp.ne.s32.totalorder %s184, %s198
    %p200 = scmp.eq.s32.totalorder %s22, 0
    %p201 = por %p199, %p200
    %s203 = sadd.s32 %s202, 1
    %p206 = scmp.eq.s32.totalorder %s16, 1
    %p207 = scmp.ne.s32.totalorder %s202, %s204
    %p208 = scmp.eq.s32.totalorder %s16, 0
    %p209 = por %p207, %p208
    %p210 = scmp.ne.s32.totalorder %s202, %s204
    %p211 = scmp.eq.s32.totalorder %s21, 1
    %p212 = por %p210, %p211
    %p213 = scmp.ne.s32.totalorder %s204, %s205
    %p214 = scmp.eq.s32.totalorder %s21, 0
    %p215 = por %p213, %p214
    %p216 = scmp.ne.s32.totalorder %s204, %s205
    %p217 = scmp.eq.s32.totalorder %s22, 1
    %p218 = por %p216, %p217
    %p220 = scmp.ne.s32.totalorder %s205, %s219
    %p221 = scmp.eq.s32.totalorder %s22, 0
    %p222 = por %p220, %p221
    %s223 = ssub.s32 %s16, %s23
    %p224 = scmp.eq.s32.totalorder %s223, 0
    %s226 = sadd.s32 %s225, 1
    %s227 = scalar_select %p224, %s225, %s226
    %p230 = pneg %p224
    %p231 = scmp.eq.s32.totalorder %s16, 1
    %p232 = por %p230, %p231
    %p233 = scmp.ne.s32.totalorder %s225, %s228
    %p234 = scmp.eq.s32.totalorder %s16, 0
    %p235 = por %p233, %p234
    %p236 = scmp.ne.s32.totalorder %s225, %s228
    %p237 = scmp.eq.s32.totalorder %s21, 1
    %p238 = por %p236, %p237
    %p239 = scmp.ne.s32.totalorder %s228, %s229
    %p240 = scmp.eq.s32.totalorder %s21, 0
    %p241 = por %p239, %p240
    %p242 = scmp.ne.s32.totalorder %s228, %s229
    %p243 = scmp.eq.s32.totalorder %s22, 1
    %p244 = por %p242, %p243
    %p246 = scmp.ne.s32.totalorder %s229, %s245
    %p247 = scmp.eq.s32.totalorder %s22, 0
    %p248 = por %p246, %p247
    %p249 = scmp.le.s32.totalorder 1, %s16
    %p250 = scmp.lt.s32.totalorder %s16, 3
    %p251 = pnand %p249, %p250
    %p252 = pneg %p251
    // Predicated region
    $region9: #{critic_forward.1} parent=5 // pred_check
      _
    $region10: #{critic_forward.1} parent=5 // pred_check_branch
      %254 = sbr.rel (%p251) target = $region12
    $region11: #{critic_forward.1} parent=5 // pred_region
      %s255 = ssub.s32 %s16, 1
      // Predicated region
      $region13: #{critic_forward.1} parent=11 // pred_check
        %p256 = pneg %p89
      $region14: #{critic_forward.1} parent=11 // pred_check_branch
        %258 = sbr.rel (%p256) target = $region16
      $region15: #{critic_forward.1} parent=11 // pred_region
        _
      $region16: #{critic_forward.1} parent=11 // pred_fallthru
        _
      // Predicated region
      $region17: #{critic_forward.1} parent=11 // pred_check
        %p259 = pneg %p110
      $region18: #{critic_forward.1} parent=11 // pred_check_branch
        %261 = sbr.rel (%p259) target = $region20
      $region19: #{critic_forward.1} parent=11 // pred_region
        _
      $region20: #{critic_forward.1} parent=11 // pred_fallthru
        _
      // Predicated region
      $region21: #{critic_forward.1} parent=11 // pred_check
        %p262 = pneg %p131
      $region22: #{critic_forward.1} parent=11 // pred_check_branch
        %264 = sbr.rel (%p262) target = $region24
      $region23: #{critic_forward.1} parent=11 // pred_region
        _
      $region24: #{critic_forward.1} parent=11 // pred_fallthru
        _
      // Predicated region
      $region25: #{critic_forward.1} parent=11 // pred_check
        %p265 = pneg %p152
      $region26: #{critic_forward.1} parent=11 // pred_check_branch
        %267 = sbr.rel (%p265) target = $region28
      $region27: #{critic_forward.1} parent=11 // pred_region
        _
      $region28: #{critic_forward.1} parent=11 // pred_fallthru
        _
      // Predicated region
      $region29: #{critic_forward.1} parent=11 // pred_check
        %p268 = pneg %p173
      $region30: #{critic_forward.1} parent=11 // pred_check_branch
        %270 = sbr.rel (%p268) target = $region32
      $region31: #{critic_forward.1} parent=11 // pred_region
        _
      $region32: #{critic_forward.1} parent=11 // pred_fallthru
        _
      // Predicated region
      $region33: #{critic_forward.1} parent=11 // pred_check
        %p271 = pneg %p194
      $region34: #{critic_forward.1} parent=11 // pred_check_branch
        %273 = sbr.rel (%p271) target = $region36
      $region35: #{critic_forward.1} parent=11 // pred_region
        _
      $region36: #{critic_forward.1} parent=11 // pred_fallthru
        _
      // Predicated region
      $region37: #{critic_forward.1} parent=11 // pred_check
        %p274 = pneg %p215
      $region38: #{critic_forward.1} parent=11 // pred_check_branch
        %276 = sbr.rel (%p274) target = $region40
      $region39: #{critic_forward.1} parent=11 // pred_region
        _
      $region40: #{critic_forward.1} parent=11 // pred_fallthru
        _
    $region12: #{critic_forward.1} parent=5 // pred_fallthru
      _
    %p277 = scmp.lt.s32.totalorder %s16, 2
    // Predicated region
    $region41: #{critic_forward.1} parent=5 // pred_check
      %p278 = pneg %p277
    $region42: #{critic_forward.1} parent=5 // pred_check_branch
      %280 = sbr.rel (%p278) target = $region44
    $region43: #{critic_forward.1} parent=5 // pred_region
      // Predicated region
      $region45: #{critic_forward.1} parent=43 // pred_check
        %p281 = pneg %p36
      $region46: #{critic_forward.1} parent=43 // pred_check_branch
        %283 = sbr.rel (%p281) target = $region48
      $region47: #{critic_forward.1} parent=43 // pred_region
        %s284 = smul.u32 64, %s16
        %p285 = scmp.lt.s32.totalorder %s284, 127
        %s286 = scalar_select %p285, %s284, 127
        %s287 = smul.addr %s286, 8
        %s288 = scalar_lea.vmem %s0, %s287
        %s289 = smul.u32 64, %s16
      $region48: #{critic_forward.1} parent=43 // pred_fallthru
        _
      // Predicated region
      $region49: #{critic_forward.1} parent=43 // pred_check
        %p290 = pneg %p62
      $region50: #{critic_forward.1} parent=43 // pred_check_branch
        %292 = sbr.rel (%p290) target = $region52
      $region51: #{critic_forward.1} parent=43 // pred_region
        %s293 = smul.u32 64, %s16
        %p294 = scmp.lt.s32.totalorder %s293, 127
        %s295 = scalar_select %p294, %s293, 127
        %s296 = smul.addr %s295, 8
        %s297 = scalar_lea.vmem %s1, %s296
        %s298 = smul.u32 64, %s16
      $region52: #{critic_forward.1} parent=43 // pred_fallthru
        _
    $region44: #{critic_forward.1} parent=5 // pred_fallthru
      _
    %p299 = scmp.le.s32.totalorder 1, %s16
    %p300 = scmp.lt.s32.totalorder %s16, 3
    %p301 = pnand %p299, %p300
    %p302 = pneg %p301
    // Predicated region
    $region53: #{critic_forward.1} parent=5 // pred_check
      _
    $region54: #{critic_forward.1} parent=5 // pred_check_branch
      %304 = sbr.rel (%p301) target = $region56
    $region55: #{critic_forward.1} parent=5 // pred_region
      %s305 = ssub.s32 %s16, 1
      %s306 = smul.u32 64, %s21
      %p307 = scmp.lt.s32.totalorder %s306, 127
      %s308 = scalar_select %p307, %s306, 127
      %s309 = smul.addr %s308, 8
      %s310 = scalar_lea.vmem %s0, %s309
      %p311 = pneg %p42
      %p312 = pneg %p39
      %s313 = smul.u32 64, %s21
      %p314 = scmp.lt.s32.totalorder %s313, 127
      %s315 = scalar_select %p314, %s313, 127
      %s316 = smul.addr %s315, 8
      %s317 = scalar_lea.vmem %s1, %s316
      %p318 = pneg %p68
      %p319 = pneg %p65
      %p320 = pneg %p89
      %p321 = pneg %p86
      %p322 = pneg %p110
      %p323 = pneg %p107
      %p324 = pneg %p131
      %p325 = pneg %p128
      %p326 = pneg %p152
      %p327 = pneg %p149
      %p328 = pneg %p173
      %p329 = pneg %p170
      %p330 = pneg %p194
      %p331 = pneg %p191
      %p332 = pneg %p215
      %p333 = pneg %p212
      %p334 = pneg %p241
      %p335 = pneg %p238
      %s336 = smul.u32 64, %s21
      %p337 = scmp.lt.s32.totalorder %s336, 127
      %s338 = scalar_select %p337, %s336, 127
      %s339 = smul.addr %s338, 8
      %s340 = scalar_lea.vmem %s9, %s339
      %s341 = smul.u32 64, %s21
      %p342 = scmp.lt.s32.totalorder %s341, 127
      %s343 = scalar_select %p342, %s341, 127
      %s344 = smul.addr %s343, 8
      %s345 = scalar_lea.vmem %s0, %s344
      %s346 = smul.u32 64, %s21
      %s347 = smul.u32 64, %s21
      %p348 = scmp.lt.s32.totalorder %s347, 127
      %s349 = scalar_select %p348, %s347, 127
      %s350 = smul.addr %s349, 8
      %s351 = scalar_lea.vmem %s1, %s350
      %s352 = smul.u32 64, %s21
      %s353 = smul.u32 64, %s21
      %p354 = scmp.lt.s32.totalorder %s353, 127
      %s355 = scalar_select %p354, %s353, 127
      %s356 = smul.addr %s355, 8
      %s357 = scalar_lea.vmem %s9, %s356
      %s358 = smul.u32 64, %s21
      %v359 = vld [vmem:[%s345] sm:$0xff]
      %v360 = vld [vmem:[%s345 + $0x8] sm:$0xff]
      %v361 = vld [vmem:[%s345 + $0x10] sm:$0xff]
      %v362 = vld [vmem:[%s345 + $0x18] sm:$0xff]
      %v363 = vld [vmem:[%s345 + $0x20] sm:$0xff]
      %v364 = vld [vmem:[%s345 + $0x28] sm:$0xff]
      %v365 = vld [vmem:[%s345 + $0x30] sm:$0xff]
      %v366 = vld [vmem:[%s345 + $0x38] sm:$0xff]
      %v367 = vld [vmem:[%s345 + $0x40] sm:$0xff]
      %v368 = vld [vmem:[%s345 + $0x48] sm:$0xff]
      %v369 = vld [vmem:[%s345 + $0x50] sm:$0xff]
      %v370 = vld [vmem:[%s345 + $0x58] sm:$0xff]
      %v371 = vld [vmem:[%s345 + $0x60] sm:$0xff]
      %v372 = vld [vmem:[%s345 + $0x68] sm:$0xff]
      %v373 = vld [vmem:[%s345 + $0x70] sm:$0xff]
      %v374 = vld [vmem:[%s345 + $0x78] sm:$0xff]
      %v375 = vld [vmem:[%s345 + $0x80] sm:$0xff]
      %v376 = vld [vmem:[%s345 + $0x88] sm:$0xff]
      %v377 = vld [vmem:[%s345 + $0x90] sm:$0xff]
      %v378 = vld [vmem:[%s345 + $0x98] sm:$0xff]
      %v379 = vld [vmem:[%s345 + $0xa0] sm:$0xff]
      %v380 = vld [vmem:[%s345 + $0xa8] sm:$0xff]
      %v381 = vld [vmem:[%s345 + $0xb0] sm:$0xff]
      %v382 = vld [vmem:[%s345 + $0xb8] sm:$0xff]
      %v383 = vld [vmem:[%s345 + $0xc0] sm:$0xff]
      %v384 = vld [vmem:[%s345 + $0xc8] sm:$0xff]
      %v385 = vld [vmem:[%s345 + $0xd0] sm:$0xff]
      %v386 = vld [vmem:[%s345 + $0xd8] sm:$0xff]
      %v387 = vld [vmem:[%s345 + $0xe0] sm:$0xff]
      %v388 = vld [vmem:[%s345 + $0xe8] sm:$0xff]
      %v389 = vld [vmem:[%s345 + $0xf0] sm:$0xff]
      %v390 = vld [vmem:[%s345 + $0xf8] sm:$0xff]
      %v391 = vld [vmem:[%s345 + $0x100] sm:$0xff]
      %v392 = vld [vmem:[%s345 + $0x108] sm:$0xff]
      %v393 = vld [vmem:[%s345 + $0x110] sm:$0xff]
      %v394 = vld [vmem:[%s345 + $0x118] sm:$0xff]
      %v395 = vld [vmem:[%s345 + $0x120] sm:$0xff]
      %v396 = vld [vmem:[%s345 + $0x128] sm:$0xff]
      %v397 = vld [vmem:[%s345 + $0x130] sm:$0xff]
      %v398 = vld [vmem:[%s345 + $0x138] sm:$0xff]
      %v399 = vld [vmem:[%s345 + $0x140] sm:$0xff]
      %v400 = vld [vmem:[%s345 + $0x148] sm:$0xff]
      %v401 = vld [vmem:[%s345 + $0x150] sm:$0xff]
      %v402 = vld [vmem:[%s345 + $0x158] sm:$0xff]
      %v403 = vld [vmem:[%s345 + $0x160] sm:$0xff]
      %v404 = vld [vmem:[%s345 + $0x168] sm:$0xff]
      %v405 = vld [vmem:[%s345 + $0x170] sm:$0xff]
      %v406 = vld [vmem:[%s345 + $0x178] sm:$0xff]
      %v407 = vld [vmem:[%s345 + $0x180] sm:$0xff]
      %v408 = vld [vmem:[%s345 + $0x188] sm:$0xff]
      %v409 = vld [vmem:[%s345 + $0x190] sm:$0xff]
      %v410 = vld [vmem:[%s345 + $0x198] sm:$0xff]
      %v411 = vld [vmem:[%s345 + $0x1a0] sm:$0xff]
      %v412 = vld [vmem:[%s345 + $0x1a8] sm:$0xff]
      %v413 = vld [vmem:[%s345 + $0x1b0] sm:$0xff]
      %v414 = vld [vmem:[%s345 + $0x1b8] sm:$0xff]
      %v415 = vld [vmem:[%s345 + $0x1c0] sm:$0xff]
      %v416 = vld [vmem:[%s345 + $0x1c8] sm:$0xff]
      %v417 = vld [vmem:[%s345 + $0x1d0] sm:$0xff]
      %v418 = vld [vmem:[%s345 + $0x1d8] sm:$0xff]
      %v419 = vld [vmem:[%s345 + $0x1e0] sm:$0xff]
      %v420 = vld [vmem:[%s345 + $0x1e8] sm:$0xff]
      %v421 = vld [vmem:[%s345 + $0x1f0] sm:$0xff]
      %v422 = vld [vmem:[%s345 + $0x1f8] sm:$0xff]
      %v423 = vld [vmem:[%s2] sm:$0xff]
      %v424 = vld [vmem:[%s351] sm:$0xff]
      %v425 = vld [vmem:[%s351 + $0x8] sm:$0xff]
      %v426 = vld [vmem:[%s351 + $0x10] sm:$0xff]
      %v427 = vld [vmem:[%s351 + $0x18] sm:$0xff]
      %v428 = vld [vmem:[%s351 + $0x20] sm:$0xff]
      %v429 = vld [vmem:[%s351 + $0x28] sm:$0xff]
      %v430 = vld [vmem:[%s351 + $0x30] sm:$0xff]
      %v431 = vld [vmem:[%s351 + $0x38] sm:$0xff]
      %v432 = vld [vmem:[%s351 + $0x40] sm:$0xff]
      %v433 = vld [vmem:[%s351 + $0x48] sm:$0xff]
      %v434 = vld [vmem:[%s351 + $0x50] sm:$0xff]
      %v435 = vld [vmem:[%s351 + $0x58] sm:$0xff]
      %v436 = vld [vmem:[%s351 + $0x60] sm:$0xff]
      %v437 = vld [vmem:[%s351 + $0x68] sm:$0xff]
      %v438 = vld [vmem:[%s351 + $0x70] sm:$0xff]
      %v439 = vld [vmem:[%s351 + $0x78] sm:$0xff]
      %v440 = vld [vmem:[%s351 + $0x80] sm:$0xff]
      %v441 = vld [vmem:[%s351 + $0x88] sm:$0xff]
      %v442 = vld [vmem:[%s351 + $0x90] sm:$0xff]
      %v443 = vld [vmem:[%s351 + $0x98] sm:$0xff]
      %v444 = vld [vmem:[%s351 + $0xa0] sm:$0xff]
      %v445 = vld [vmem:[%s351 + $0xa8] sm:$0xff]
      %v446 = vld [vmem:[%s351 + $0xb0] sm:$0xff]
      %v447 = vld [vmem:[%s351 + $0xb8] sm:$0xff]
      %v448 = vld [vmem:[%s351 + $0xc0] sm:$0xff]
      %v449 = vld [vmem:[%s351 + $0xc8] sm:$0xff]
      %v450 = vld [vmem:[%s351 + $0xd0] sm:$0xff]
      %v451 = vld [vmem:[%s351 + $0xd8] sm:$0xff]
      %v452 = vld [vmem:[%s351 + $0xe0] sm:$0xff]
      %v453 = vld [vmem:[%s351 + $0xe8] sm:$0xff]
      %v454 = vld [vmem:[%s351 + $0xf0] sm:$0xff]
      %v455 = vld [vmem:[%s351 + $0xf8] sm:$0xff]
      %v456 = vld [vmem:[%s351 + $0x100] sm:$0xff]
      %v457 = vld [vmem:[%s351 + $0x108] sm:$0xff]
      %v458 = vld [vmem:[%s351 + $0x110] sm:$0xff]
      %v459 = vld [vmem:[%s351 + $0x118] sm:$0xff]
      %v460 = vld [vmem:[%s351 + $0x120] sm:$0xff]
      %v461 = vld [vmem:[%s351 + $0x128] sm:$0xff]
      %v462 = vld [vmem:[%s351 + $0x130] sm:$0xff]
      %v463 = vld [vmem:[%s351 + $0x138] sm:$0xff]
      %v464 = vld [vmem:[%s351 + $0x140] sm:$0xff]
      %v465 = vld [vmem:[%s351 + $0x148] sm:$0xff]
      %v466 = vld [vmem:[%s351 + $0x150] sm:$0xff]
      %v467 = vld [vmem:[%s351 + $0x158] sm:$0xff]
      %v468 = vld [vmem:[%s351 + $0x160] sm:$0xff]
      %v469 = vld [vmem:[%s351 + $0x168] sm:$0xff]
      %v470 = vld [vmem:[%s351 + $0x170] sm:$0xff]
      %v471 = vld [vmem:[%s351 + $0x178] sm:$0xff]
      %v472 = vld [vmem:[%s351 + $0x180] sm:$0xff]
      %v473 = vld [vmem:[%s351 + $0x188] sm:$0xff]
      %v474 = vld [vmem:[%s351 + $0x190] sm:$0xff]
      %v475 = vld [vmem:[%s351 + $0x198] sm:$0xff]
      %v476 = vld [vmem:[%s351 + $0x1a0] sm:$0xff]
      %v477 = vld [vmem:[%s351 + $0x1a8] sm:$0xff]
      %v478 = vld [vmem:[%s351 + $0x1b0] sm:$0xff]
      %v479 = vld [vmem:[%s351 + $0x1b8] sm:$0xff]
      %v480 = vld [vmem:[%s351 + $0x1c0] sm:$0xff]
      %v481 = vld [vmem:[%s351 + $0x1c8] sm:$0xff]
      %v482 = vld [vmem:[%s351 + $0x1d0] sm:$0xff]
      %v483 = vld [vmem:[%s351 + $0x1d8] sm:$0xff]
      %v484 = vld [vmem:[%s351 + $0x1e0] sm:$0xff]
      %v485 = vld [vmem:[%s351 + $0x1e8] sm:$0xff]
      %v486 = vld [vmem:[%s351 + $0x1f0] sm:$0xff]
      %v487 = vld [vmem:[%s351 + $0x1f8] sm:$0xff]
      %v488 = vld [vmem:[%s3] sm:$0xf]
      %vm489 = vcmask 31744
      %v491 = vsel %vm489, %v424, 0
      %v494 = vsel %vm489, %v425, 0
      %v497 = vsel %vm489, %v426, 0
      %v500 = vsel %vm489, %v427, 0
      %v503 = vsel %vm489, %v428, 0
      %v506 = vsel %vm489, %v429, 0
      %v509 = vsel %vm489, %v430, 0
      %v512 = vsel %vm489, %v431, 0
      %v515 = vsel %vm489, %v432, 0
      %v518 = vsel %vm489, %v433, 0
      %v521 = vsel %vm489, %v434, 0
      %v524 = vsel %vm489, %v435, 0
      %v527 = vsel %vm489, %v436, 0
      %v530 = vsel %vm489, %v437, 0
      %v533 = vsel %vm489, %v438, 0
      %v536 = vsel %vm489, %v439, 0
      %v539 = vsel %vm489, %v440, 0
      %v542 = vsel %vm489, %v441, 0
      %v545 = vsel %vm489, %v442, 0
      %v548 = vsel %vm489, %v443, 0
      %v551 = vsel %vm489, %v444, 0
      %v554 = vsel %vm489, %v445, 0
      %v557 = vsel %vm489, %v446, 0
      %v560 = vsel %vm489, %v447, 0
      %v563 = vsel %vm489, %v448, 0
      %v566 = vsel %vm489, %v449, 0
      %v569 = vsel %vm489, %v450, 0
      %v572 = vsel %vm489, %v451, 0
      %v575 = vsel %vm489, %v452, 0
      %v578 = vsel %vm489, %v453, 0
      %v581 = vsel %vm489, %v454, 0
      %v584 = vsel %vm489, %v455, 0
      %v587 = vsel %vm489, %v456, 0
      %v590 = vsel %vm489, %v457, 0
      %v593 = vsel %vm489, %v458, 0
      %v596 = vsel %vm489, %v459, 0
      %v599 = vsel %vm489, %v460, 0
      %v602 = vsel %vm489, %v461, 0
      %v605 = vsel %vm489, %v462, 0
      %v608 = vsel %vm489, %v463, 0
      %v611 = vsel %vm489, %v464, 0
      %v614 = vsel %vm489, %v465, 0
      %v617 = vsel %vm489, %v466, 0
      %v620 = vsel %vm489, %v467, 0
      %v623 = vsel %vm489, %v468, 0
      %v626 = vsel %vm489, %v469, 0
      %v629 = vsel %vm489, %v470, 0
      %v632 = vsel %vm489, %v471, 0
      %v635 = vsel %vm489, %v472, 0
      %v638 = vsel %vm489, %v473, 0
      %v641 = vsel %vm489, %v474, 0
      %v644 = vsel %vm489, %v475, 0
      %v647 = vsel %vm489, %v476, 0
      %v650 = vsel %vm489, %v477, 0
      %v653 = vsel %vm489, %v478, 0
      %v656 = vsel %vm489, %v479, 0
      %v659 = vsel %vm489, %v480, 0
      %v662 = vsel %vm489, %v481, 0
      %v665 = vsel %vm489, %v482, 0
      %v668 = vsel %vm489, %v483, 0
      %v671 = vsel %vm489, %v484, 0
      %v674 = vsel %vm489, %v485, 0
      %v677 = vsel %vm489, %v486, 0
      %v680 = vsel %vm489, %v487, 0
      %vm682 = vcmask 1043456
      %v684 = vsel %vm682, %v488, 0
      %686 = vmatpush.msra.mxu0 0.0
      %687 = vmatpush.msra.mxu0 0.0
      %688 = vmatpush.msra.mxu0 0.0
      %689 = vmatpush.msra.mxu0 0.0
      %690 = vmatpush.msra.mxu0 0.0
      %691 = vmatpush.msra.mxu0 0.0
      %692 = vmatpush.msra.mxu0 0.0
      %693 = vmatpush.msra.mxu0 0.0
      %694 = vmatpush.msra.mxu0 0.0
      %695 = vmatpush.msra.mxu0 0.0
      %696 = vmatpush.msra.mxu0 0.0
      %697 = vmatpush.msra.mxu0 0.0
      %698 = vmatpush.msra.mxu0 0.0
      %699 = vmatpush.msra.mxu0 0.0
      %700 = vmatpush.msra.mxu0 0.0
      %701 = vmatpush.msra.mxu0 %v684
      %702 = vmatmul.f32.gmra.mxu0 %v491
      %v703 = vpop.f32.mrf.mxu0
      %v704 = vadd.f32 0.0, %v703
      %705 = vmatmul.f32.gmra.mxu0 %v494
      %v706 = vpop.f32.mrf.mxu0
      %v707 = vadd.f32 0.0, %v706
      %708 = vmatmul.f32.gmra.mxu0 %v497
      %v709 = vpop.f32.mrf.mxu0
      %v710 = vadd.f32 0.0, %v709
      %711 = vmatmul.f32.gmra.mxu0 %v500
      %v712 = vpop.f32.mrf.mxu0
      %v713 = vadd.f32 0.0, %v712
      %714 = vmatmul.f32.gmra.mxu0 %v503
      %v715 = vpop.f32.mrf.mxu0
      %v716 = vadd.f32 0.0, %v715
      %717 = vmatmul.f32.gmra.mxu0 %v506
      %v718 = vpop.f32.mrf.mxu0
      %v719 = vadd.f32 0.0, %v718
      %720 = vmatmul.f32.gmra.mxu0 %v509
      %v721 = vpop.f32.mrf.mxu0
      %v722 = vadd.f32 0.0, %v721
      %723 = vmatmul.f32.gmra.mxu0 %v512
      %v724 = vpop.f32.mrf.mxu0
      %v725 = vadd.f32 0.0, %v724
      %726 = vmatmul.f32.gmra.mxu0 %v515
      %v727 = vpop.f32.mrf.mxu0
      %v728 = vadd.f32 0.0, %v727
      %729 = vmatmul.f32.gmra.mxu0 %v518
      %v730 = vpop.f32.mrf.mxu0
      %v731 = vadd.f32 0.0, %v730
      %732 = vmatmul.f32.gmra.mxu0 %v521
      %v733 = vpop.f32.mrf.mxu0
      %v734 = vadd.f32 0.0, %v733
      %735 = vmatmul.f32.gmra.mxu0 %v524
      %v736 = vpop.f32.mrf.mxu0
      %v737 = vadd.f32 0.0, %v736
      %738 = vmatmul.f32.gmra.mxu0 %v527
      %v739 = vpop.f32.mrf.mxu0
      %v740 = vadd.f32 0.0, %v739
      %741 = vmatmul.f32.gmra.mxu0 %v530
      %v742 = vpop.f32.mrf.mxu0
      %v743 = vadd.f32 0.0, %v742
      %744 = vmatmul.f32.gmra.mxu0 %v533
      %v745 = vpop.f32.mrf.mxu0
      %v746 = vadd.f32 0.0, %v745
      %747 = vmatmul.f32.gmra.mxu0 %v536
      %v748 = vpop.f32.mrf.mxu0
      %v749 = vadd.f32 0.0, %v748
      %750 = vmatmul.f32.gmra.mxu0 %v539
      %v751 = vpop.f32.mrf.mxu0
      %v752 = vadd.f32 0.0, %v751
      %753 = vmatmul.f32.gmra.mxu0 %v542
      %v754 = vpop.f32.mrf.mxu0
      %v755 = vadd.f32 0.0, %v754
      %756 = vmatmul.f32.gmra.mxu0 %v545
      %v757 = vpop.f32.mrf.mxu0
      %v758 = vadd.f32 0.0, %v757
      %759 = vmatmul.f32.gmra.mxu0 %v548
      %v760 = vpop.f32.mrf.mxu0
      %v761 = vadd.f32 0.0, %v760
      %762 = vmatmul.f32.gmra.mxu0 %v551
      %v763 = vpop.f32.mrf.mxu0
      %v764 = vadd.f32 0.0, %v763
      %765 = vmatmul.f32.gmra.mxu0 %v554
      %v766 = vpop.f32.mrf.mxu0
      %v767 = vadd.f32 0.0, %v766
      %768 = vmatmul.f32.gmra.mxu0 %v557
      %v769 = vpop.f32.mrf.mxu0
      %v770 = vadd.f32 0.0, %v769
      %771 = vmatmul.f32.gmra.mxu0 %v560
      %v772 = vpop.f32.mrf.mxu0
      %v773 = vadd.f32 0.0, %v772
      %774 = vmatmul.f32.gmra.mxu0 %v563
      %v775 = vpop.f32.mrf.mxu0
      %v776 = vadd.f32 0.0, %v775
      %777 = vmatmul.f32.gmra.mxu0 %v566
      %v778 = vpop.f32.mrf.mxu0
      %v779 = vadd.f32 0.0, %v778
      %780 = vmatmul.f32.gmra.mxu0 %v569
      %v781 = vpop.f32.mrf.mxu0
      %v782 = vadd.f32 0.0, %v781
      %783 = vmatmul.f32.gmra.mxu0 %v572
      %v784 = vpop.f32.mrf.mxu0
      %v785 = vadd.f32 0.0, %v784
      %786 = vmatmul.f32.gmra.mxu0 %v575
      %v787 = vpop.f32.mrf.mxu0
      %v788 = vadd.f32 0.0, %v787
      %789 = vmatmul.f32.gmra.mxu0 %v578
      %v790 = vpop.f32.mrf.mxu0
      %v791 = vadd.f32 0.0, %v790
      %792 = vmatmul.f32.gmra.mxu0 %v581
      %v793 = vpop.f32.mrf.mxu0
      %v794 = vadd.f32 0.0, %v793
      %795 = vmatmul.f32.gmra.mxu0 %v584
      %v796 = vpop.f32.mrf.mxu0
      %v797 = vadd.f32 0.0, %v796
      %798 = vmatmul.f32.gmra.mxu0 %v587
      %v799 = vpop.f32.mrf.mxu0
      %v800 = vadd.f32 0.0, %v799
      %801 = vmatmul.f32.gmra.mxu0 %v590
      %v802 = vpop.f32.mrf.mxu0
      %v803 = vadd.f32 0.0, %v802
      %804 = vmatmul.f32.gmra.mxu0 %v593
      %v805 = vpop.f32.mrf.mxu0
      %v806 = vadd.f32 0.0, %v805
      %807 = vmatmul.f32.gmra.mxu0 %v596
      %v808 = vpop.f32.mrf.mxu0
      %v809 = vadd.f32 0.0, %v808
      %810 = vmatmul.f32.gmra.mxu0 %v599
      %v811 = vpop.f32.mrf.mxu0
      %v812 = vadd.f32 0.0, %v811
      %813 = vmatmul.f32.gmra.mxu0 %v602
      %v814 = vpop.f32.mrf.mxu0
      %v815 = vadd.f32 0.0, %v814
      %816 = vmatmul.f32.gmra.mxu0 %v605
      %v817 = vpop.f32.mrf.mxu0
      %v818 = vadd.f32 0.0, %v817
      %819 = vmatmul.f32.gmra.mxu0 %v608
      %v820 = vpop.f32.mrf.mxu0
      %v821 = vadd.f32 0.0, %v820
      %822 = vmatmul.f32.gmra.mxu0 %v611
      %v823 = vpop.f32.mrf.mxu0
      %v824 = vadd.f32 0.0, %v823
      %825 = vmatmul.f32.gmra.mxu0 %v614
      %v826 = vpop.f32.mrf.mxu0
      %v827 = vadd.f32 0.0, %v826
      %828 = vmatmul.f32.gmra.mxu0 %v617
      %v829 = vpop.f32.mrf.mxu0
      %v830 = vadd.f32 0.0, %v829
      %831 = vmatmul.f32.gmra.mxu0 %v620
      %v832 = vpop.f32.mrf.mxu0
      %v833 = vadd.f32 0.0, %v832
      %834 = vmatmul.f32.gmra.mxu0 %v623
      %v835 = vpop.f32.mrf.mxu0
      %v836 = vadd.f32 0.0, %v835
      %837 = vmatmul.f32.gmra.mxu0 %v626
      %v838 = vpop.f32.mrf.mxu0
      %v839 = vadd.f32 0.0, %v838
      %840 = vmatmul.f32.gmra.mxu0 %v629
      %v841 = vpop.f32.mrf.mxu0
      %v842 = vadd.f32 0.0, %v841
      %843 = vmatmul.f32.gmra.mxu0 %v632
      %v844 = vpop.f32.mrf.mxu0
      %v845 = vadd.f32 0.0, %v844
      %846 = vmatmul.f32.gmra.mxu0 %v635
      %v847 = vpop.f32.mrf.mxu0
      %v848 = vadd.f32 0.0, %v847
      %849 = vmatmul.f32.gmra.mxu0 %v638
      %v850 = vpop.f32.mrf.mxu0
      %v851 = vadd.f32 0.0, %v850
      %852 = vmatmul.f32.gmra.mxu0 %v641
      %v853 = vpop.f32.mrf.mxu0
      %v854 = vadd.f32 0.0, %v853
      %855 = vmatmul.f32.gmra.mxu0 %v644
      %v856 = vpop.f32.mrf.mxu0
      %v857 = vadd.f32 0.0, %v856
      %858 = vmatmul.f32.gmra.mxu0 %v647
      %v859 = vpop.f32.mrf.mxu0
      %v860 = vadd.f32 0.0, %v859
      %861 = vmatmul.f32.gmra.mxu0 %v650
      %v862 = vpop.f32.mrf.mxu0
      %v863 = vadd.f32 0.0, %v862
      %864 = vmatmul.f32.gmra.mxu0 %v653
      %v865 = vpop.f32.mrf.mxu0
      %v866 = vadd.f32 0.0, %v865
      %867 = vmatmul.f32.gmra.mxu0 %v656
      %v868 = vpop.f32.mrf.mxu0
      %v869 = vadd.f32 0.0, %v868
      %870 = vmatmul.f32.gmra.mxu0 %v659
      %v871 = vpop.f32.mrf.mxu0
      %v872 = vadd.f32 0.0, %v871
      %873 = vmatmul.f32.gmra.mxu0 %v662
      %v874 = vpop.f32.mrf.mxu0
      %v875 = vadd.f32 0.0, %v874
      %876 = vmatmul.f32.gmra.mxu0 %v665
      %v877 = vpop.f32.mrf.mxu0
      %v878 = vadd.f32 0.0, %v877
      %879 = vmatmul.f32.gmra.mxu0 %v668
      %v880 = vpop.f32.mrf.mxu0
      %v881 = vadd.f32 0.0, %v880
      %882 = vmatmul.f32.gmra.mxu0 %v671
      %v883 = vpop.f32.mrf.mxu0
      %v884 = vadd.f32 0.0, %v883
      %885 = vmatmul.f32.gmra.mxu0 %v674
      %v886 = vpop.f32.mrf.mxu0
      %v887 = vadd.f32 0.0, %v886
      %888 = vmatmul.f32.gmra.mxu0 %v677
      %v889 = vpop.f32.mrf.mxu0
      %v890 = vadd.f32 0.0, %v889
      %891 = vmatmul.f32.gmra.mxu0 %v680
      %v892 = vpop.f32.mrf.mxu0
      %v893 = vadd.f32 0.0, %v892
      %894 = vdwg.mxu0
      %vm895 = vcmask 64512
      %v897 = vsel %vm895, %v359, 0
      %v900 = vsel %vm895, %v360, 0
      %v903 = vsel %vm895, %v361, 0
      %v906 = vsel %vm895, %v362, 0
      %v909 = vsel %vm895, %v363, 0
      %v912 = vsel %vm895, %v364, 0
      %v915 = vsel %vm895, %v365, 0
      %v918 = vsel %vm895, %v366, 0
      %v921 = vsel %vm895, %v367, 0
      %v924 = vsel %vm895, %v368, 0
      %v927 = vsel %vm895, %v369, 0
      %v930 = vsel %vm895, %v370, 0
      %v933 = vsel %vm895, %v371, 0
      %v936 = vsel %vm895, %v372, 0
      %v939 = vsel %vm895, %v373, 0
      %v942 = vsel %vm895, %v374, 0
      %v945 = vsel %vm895, %v375, 0
      %v948 = vsel %vm895, %v376, 0
      %v951 = vsel %vm895, %v377, 0
      %v954 = vsel %vm895, %v378, 0
      %v957 = vsel %vm895, %v379, 0
      %v960 = vsel %vm895, %v380, 0
      %v963 = vsel %vm895, %v381, 0
      %v966 = vsel %vm895, %v382, 0
      %v969 = vsel %vm895, %v383, 0
      %v972 = vsel %vm895, %v384, 0
      %v975 = vsel %vm895, %v385, 0
      %v978 = vsel %vm895, %v386, 0
      %v981 = vsel %vm895, %v387, 0
      %v984 = vsel %vm895, %v388, 0
      %v987 = vsel %vm895, %v389, 0
      %v990 = vsel %vm895, %v390, 0
      %v993 = vsel %vm895, %v391, 0
      %v996 = vsel %vm895, %v392, 0
      %v999 = vsel %vm895, %v393, 0
      %v1002 = vsel %vm895, %v394, 0
      %v1005 = vsel %vm895, %v395, 0
      %v1008 = vsel %vm895, %v396, 0
      %v1011 = vsel %vm895, %v397, 0
      %v1014 = vsel %vm895, %v398, 0
      %v1017 = vsel %vm895, %v399, 0
      %v1020 = vsel %vm895, %v400, 0
      %v1023 = vsel %vm895, %v401, 0
      %v1026 = vsel %vm895, %v402, 0
      %v1029 = vsel %vm895, %v403, 0
      %v1032 = vsel %vm895, %v404, 0
      %v1035 = vsel %vm895, %v405, 0
      %v1038 = vsel %vm895, %v406, 0
      %v1041 = vsel %vm895, %v407, 0
      %v1044 = vsel %vm895, %v408, 0
      %v1047 = vsel %vm895, %v409, 0
      %v1050 = vsel %vm895, %v410, 0
      %v1053 = vsel %vm895, %v411, 0
      %v1056 = vsel %vm895, %v412, 0
      %v1059 = vsel %vm895, %v413, 0
      %v1062 = vsel %vm895, %v414, 0
      %v1065 = vsel %vm895, %v415, 0
      %v1068 = vsel %vm895, %v416, 0
      %v1071 = vsel %vm895, %v417, 0
      %v1074 = vsel %vm895, %v418, 0
      %v1077 = vsel %vm895, %v419, 0
      %v1080 = vsel %vm895, %v420, 0
      %v1083 = vsel %vm895, %v421, 0
      %v1086 = vsel %vm895, %v422, 0
      %1088 = vmatpush.msra.mxu0 0.0
      %1089 = vmatpush.msra.mxu0 0.0
      %1090 = vmatpush.msra.mxu0 0.0
      %1091 = vmatpush.msra.mxu0 0.0
      %1092 = vmatpush.msra.mxu0 0.0
      %1093 = vmatpush.msra.mxu0 0.0
      %1094 = vmatpush.msra.mxu0 0.0
      %1095 = vmatpush.msra.mxu0 0.0
      %1096 = vmatpush.msra.mxu0 0.0
      %1097 = vmatpush.msra.mxu0 0.0
      %1098 = vmatpush.msra.mxu0 0.0
      %1099 = vmatpush.msra.mxu0 0.0
      %1100 = vmatpush.msra.mxu0 0.0
      %1101 = vmatpush.msra.mxu0 0.0
      %1102 = vmatpush.msra.mxu0 0.0
      %1103 = vmatpush.msra.mxu0 %v423
      %1104 = vmatmul.f32.gmra.mxu0 %v897
      %v1105 = vpop.f32.mrf.mxu0
      %v1106 = vadd.f32 %v704, %v1105
      %1107 = vmatmul.f32.gmra.mxu0 %v900
      %v1108 = vpop.f32.mrf.mxu0
      %v1109 = vadd.f32 %v707, %v1108
      %1110 = vmatmul.f32.gmra.mxu0 %v903
      %v1111 = vpop.f32.mrf.mxu0
      %v1112 = vadd.f32 %v710, %v1111
      %1113 = vmatmul.f32.gmra.mxu0 %v906
      %v1114 = vpop.f32.mrf.mxu0
      %v1115 = vadd.f32 %v713, %v1114
      %1116 = vmatmul.f32.gmra.mxu0 %v909
      %v1117 = vpop.f32.mrf.mxu0
      %v1118 = vadd.f32 %v716, %v1117
      %1119 = vmatmul.f32.gmra.mxu0 %v912
      %v1120 = vpop.f32.mrf.mxu0
      %v1121 = vadd.f32 %v719, %v1120
      %1122 = vmatmul.f32.gmra.mxu0 %v915
      %v1123 = vpop.f32.mrf.mxu0
      %v1124 = vadd.f32 %v722, %v1123
      %1125 = vmatmul.f32.gmra.mxu0 %v918
      %v1126 = vpop.f32.mrf.mxu0
      %v1127 = vadd.f32 %v725, %v1126
      %1128 = vmatmul.f32.gmra.mxu0 %v921
      %v1129 = vpop.f32.mrf.mxu0
      %v1130 = vadd.f32 %v728, %v1129
      %1131 = vmatmul.f32.gmra.mxu0 %v924
      %v1132 = vpop.f32.mrf.mxu0
      %v1133 = vadd.f32 %v731, %v1132
      %1134 = vmatmul.f32.gmra.mxu0 %v927
      %v1135 = vpop.f32.mrf.mxu0
      %v1136 = vadd.f32 %v734, %v1135
      %1137 = vmatmul.f32.gmra.mxu0 %v930
      %v1138 = vpop.f32.mrf.mxu0
      %v1139 = vadd.f32 %v737, %v1138
      %1140 = vmatmul.f32.gmra.mxu0 %v933
      %v1141 = vpop.f32.mrf.mxu0
      %v1142 = vadd.f32 %v740, %v1141
      %1143 = vmatmul.f32.gmra.mxu0 %v936
      %v1144 = vpop.f32.mrf.mxu0
      %v1145 = vadd.f32 %v743, %v1144
      %1146 = vmatmul.f32.gmra.mxu0 %v939
      %v1147 = vpop.f32.mrf.mxu0
      %v1148 = vadd.f32 %v746, %v1147
      %1149 = vmatmul.f32.gmra.mxu0 %v942
      %v1150 = vpop.f32.mrf.mxu0
      %v1151 = vadd.f32 %v749, %v1150
      %1152 = vmatmul.f32.gmra.mxu0 %v945
      %v1153 = vpop.f32.mrf.mxu0
      %v1154 = vadd.f32 %v752, %v1153
      %1155 = vmatmul.f32.gmra.mxu0 %v948
      %v1156 = vpop.f32.mrf.mxu0
      %v1157 = vadd.f32 %v755, %v1156
      %1158 = vmatmul.f32.gmra.mxu0 %v951
      %v1159 = vpop.f32.mrf.mxu0
      %v1160 = vadd.f32 %v758, %v1159
      %1161 = vmatmul.f32.gmra.mxu0 %v954
      %v1162 = vpop.f32.mrf.mxu0
      %v1163 = vadd.f32 %v761, %v1162
      %1164 = vmatmul.f32.gmra.mxu0 %v957
      %v1165 = vpop.f32.mrf.mxu0
      %v1166 = vadd.f32 %v764, %v1165
      %1167 = vmatmul.f32.gmra.mxu0 %v960
      %v1168 = vpop.f32.mrf.mxu0
      %v1169 = vadd.f32 %v767, %v1168
      %1170 = vmatmul.f32.gmra.mxu0 %v963
      %v1171 = vpop.f32.mrf.mxu0
      %v1172 = vadd.f32 %v770, %v1171
      %1173 = vmatmul.f32.gmra.mxu0 %v966
      %v1174 = vpop.f32.mrf.mxu0
      %v1175 = vadd.f32 %v773, %v1174
      %1176 = vmatmul.f32.gmra.mxu0 %v969
      %v1177 = vpop.f32.mrf.mxu0
      %v1178 = vadd.f32 %v776, %v1177
      %1179 = vmatmul.f32.gmra.mxu0 %v972
      %v1180 = vpop.f32.mrf.mxu0
      %v1181 = vadd.f32 %v779, %v1180
      %1182 = vmatmul.f32.gmra.mxu0 %v975
      %v1183 = vpop.f32.mrf.mxu0
      %v1184 = vadd.f32 %v782, %v1183
      %1185 = vmatmul.f32.gmra.mxu0 %v978
      %v1186 = vpop.f32.mrf.mxu0
      %v1187 = vadd.f32 %v785, %v1186
      %1188 = vmatmul.f32.gmra.mxu0 %v981
      %v1189 = vpop.f32.mrf.mxu0
      %v1190 = vadd.f32 %v788, %v1189
      %1191 = vmatmul.f32.gmra.mxu0 %v984
      %v1192 = vpop.f32.mrf.mxu0
      %v1193 = vadd.f32 %v791, %v1192
      %1194 = vmatmul.f32.gmra.mxu0 %v987
      %v1195 = vpop.f32.mrf.mxu0
      %v1196 = vadd.f32 %v794, %v1195
      %1197 = vmatmul.f32.gmra.mxu0 %v990
      %v1198 = vpop.f32.mrf.mxu0
      %v1199 = vadd.f32 %v797, %v1198
      %1200 = vmatmul.f32.gmra.mxu0 %v993
      %v1201 = vpop.f32.mrf.mxu0
      %v1202 = vadd.f32 %v800, %v1201
      %1203 = vmatmul.f32.gmra.mxu0 %v996
      %v1204 = vpop.f32.mrf.mxu0
      %v1205 = vadd.f32 %v803, %v1204
      %1206 = vmatmul.f32.gmra.mxu0 %v999
      %v1207 = vpop.f32.mrf.mxu0
      %v1208 = vadd.f32 %v806, %v1207
      %1209 = vmatmul.f32.gmra.mxu0 %v1002
      %v1210 = vpop.f32.mrf.mxu0
      %v1211 = vadd.f32 %v809, %v1210
      %1212 = vmatmul.f32.gmra.mxu0 %v1005
      %v1213 = vpop.f32.mrf.mxu0
      %v1214 = vadd.f32 %v812, %v1213
      %1215 = vmatmul.f32.gmra.mxu0 %v1008
      %v1216 = vpop.f32.mrf.mxu0
      %v1217 = vadd.f32 %v815, %v1216
      %1218 = vmatmul.f32.gmra.mxu0 %v1011
      %v1219 = vpop.f32.mrf.mxu0
      %v1220 = vadd.f32 %v818, %v1219
      %1221 = vmatmul.f32.gmra.mxu0 %v1014
      %v1222 = vpop.f32.mrf.mxu0
      %v1223 = vadd.f32 %v821, %v1222
      %1224 = vmatmul.f32.gmra.mxu0 %v1017
      %v1225 = vpop.f32.mrf.mxu0
      %v1226 = vadd.f32 %v824, %v1225
      %1227 = vmatmul.f32.gmra.mxu0 %v1020
      %v1228 = vpop.f32.mrf.mxu0
      %v1229 = vadd.f32 %v827, %v1228
      %1230 = vmatmul.f32.gmra.mxu0 %v1023
      %v1231 = vpop.f32.mrf.mxu0
      %v1232 = vadd.f32 %v830, %v1231
      %1233 = vmatmul.f32.gmra.mxu0 %v1026
      %v1234 = vpop.f32.mrf.mxu0
      %v1235 = vadd.f32 %v833, %v1234
      %1236 = vmatmul.f32.gmra.mxu0 %v1029
      %v1237 = vpop.f32.mrf.mxu0
      %v1238 = vadd.f32 %v836, %v1237
      %1239 = vmatmul.f32.gmra.mxu0 %v1032
      %v1240 = vpop.f32.mrf.mxu0
      %v1241 = vadd.f32 %v839, %v1240
      %1242 = vmatmul.f32.gmra.mxu0 %v1035
      %v1243 = vpop.f32.mrf.mxu0
      %v1244 = vadd.f32 %v842, %v1243
      %1245 = vmatmul.f32.gmra.mxu0 %v1038
      %v1246 = vpop.f32.mrf.mxu0
      %v1247 = vadd.f32 %v845, %v1246
      %1248 = vmatmul.f32.gmra.mxu0 %v1041
      %v1249 = vpop.f32.mrf.mxu0
      %v1250 = vadd.f32 %v848, %v1249
      %1251 = vmatmul.f32.gmra.mxu0 %v1044
      %v1252 = vpop.f32.mrf.mxu0
      %v1253 = vadd.f32 %v851, %v1252
      %1254 = vmatmul.f32.gmra.mxu0 %v1047
      %v1255 = vpop.f32.mrf.mxu0
      %v1256 = vadd.f32 %v854, %v1255
      %1257 = vmatmul.f32.gmra.mxu0 %v1050
      %v1258 = vpop.f32.mrf.mxu0
      %v1259 = vadd.f32 %v857, %v1258
      %1260 = vmatmul.f32.gmra.mxu0 %v1053
      %v1261 = vpop.f32.mrf.mxu0
      %v1262 = vadd.f32 %v860, %v1261
      %1263 = vmatmul.f32.gmra.mxu0 %v1056
      %v1264 = vpop.f32.mrf.mxu0
      %v1265 = vadd.f32 %v863, %v1264
      %1266 = vmatmul.f32.gmra.mxu0 %v1059
      %v1267 = vpop.f32.mrf.mxu0
      %v1268 = vadd.f32 %v866, %v1267
      %1269 = vmatmul.f32.gmra.mxu0 %v1062
      %v1270 = vpop.f32.mrf.mxu0
      %v1271 = vadd.f32 %v869, %v1270
      %1272 = vmatmul.f32.gmra.mxu0 %v1065
      %v1273 = vpop.f32.mrf.mxu0
      %v1274 = vadd.f32 %v872, %v1273
      %1275 = vmatmul.f32.gmra.mxu0 %v1068
      %v1276 = vpop.f32.mrf.mxu0
      %v1277 = vadd.f32 %v875, %v1276
      %1278 = vmatmul.f32.gmra.mxu0 %v1071
      %v1279 = vpop.f32.mrf.mxu0
      %v1280 = vadd.f32 %v878, %v1279
      %1281 = vmatmul.f32.gmra.mxu0 %v1074
      %v1282 = vpop.f32.mrf.mxu0
      %v1283 = vadd.f32 %v881, %v1282
      %1284 = vmatmul.f32.gmra.mxu0 %v1077
      %v1285 = vpop.f32.mrf.mxu0
      %v1286 = vadd.f32 %v884, %v1285
      %1287 = vmatmul.f32.gmra.mxu0 %v1080
      %v1288 = vpop.f32.mrf.mxu0
      %v1289 = vadd.f32 %v887, %v1288
      %1290 = vmatmul.f32.gmra.mxu0 %v1083
      %v1291 = vpop.f32.mrf.mxu0
      %v1292 = vadd.f32 %v890, %v1291
      %1293 = vmatmul.f32.gmra.mxu0 %v1086
      %v1294 = vpop.f32.mrf.mxu0
      %v1295 = vadd.f32 %v893, %v1294
      %1296 = vdwg.mxu0
      %v1297 = vld [vmem:[%s4] sm:$0x1]
      %v1299 = vperm.slane %v1297, 0
      %v1301 = vadd.f32 %v1106, %v1299
      %v1302 = vadd.f32 %v1109, %v1299
      %v1303 = vadd.f32 %v1112, %v1299
      %v1304 = vadd.f32 %v1115, %v1299
      %v1305 = vadd.f32 %v1118, %v1299
      %v1306 = vadd.f32 %v1121, %v1299
      %v1307 = vadd.f32 %v1124, %v1299
      %v1308 = vadd.f32 %v1127, %v1299
      %v1309 = vadd.f32 %v1130, %v1299
      %v1310 = vadd.f32 %v1133, %v1299
      %v1311 = vadd.f32 %v1136, %v1299
      %v1312 = vadd.f32 %v1139, %v1299
      %v1313 = vadd.f32 %v1142, %v1299
      %v1314 = vadd.f32 %v1145, %v1299
      %v1315 = vadd.f32 %v1148, %v1299
      %v1316 = vadd.f32 %v1151, %v1299
      %v1317 = vadd.f32 %v1154, %v1299
      %v1318 = vadd.f32 %v1157, %v1299
      %v1319 = vadd.f32 %v1160, %v1299
      %v1320 = vadd.f32 %v1163, %v1299
      %v1321 = vadd.f32 %v1166, %v1299
      %v1322 = vadd.f32 %v1169, %v1299
      %v1323 = vadd.f32 %v1172, %v1299
      %v1324 = vadd.f32 %v1175, %v1299
      %v1325 = vadd.f32 %v1178, %v1299
      %v1326 = vadd.f32 %v1181, %v1299
      %v1327 = vadd.f32 %v1184, %v1299
      %v1328 = vadd.f32 %v1187, %v1299
      %v1329 = vadd.f32 %v1190, %v1299
      %v1330 = vadd.f32 %v1193, %v1299
      %v1331 = vadd.f32 %v1196, %v1299
      %v1332 = vadd.f32 %v1199, %v1299
      %v1333 = vadd.f32 %v1202, %v1299
      %v1334 = vadd.f32 %v1205, %v1299
      %v1335 = vadd.f32 %v1208, %v1299
      %v1336 = vadd.f32 %v1211, %v1299
      %v1337 = vadd.f32 %v1214, %v1299
      %v1338 = vadd.f32 %v1217, %v1299
      %v1339 = vadd.f32 %v1220, %v1299
      %v1340 = vadd.f32 %v1223, %v1299
      %v1341 = vadd.f32 %v1226, %v1299
      %v1342 = vadd.f32 %v1229, %v1299
      %v1343 = vadd.f32 %v1232, %v1299
      %v1344 = vadd.f32 %v1235, %v1299
      %v1345 = vadd.f32 %v1238, %v1299
      %v1346 = vadd.f32 %v1241, %v1299
      %v1347 = vadd.f32 %v1244, %v1299
      %v1348 = vadd.f32 %v1247, %v1299
      %v1349 = vadd.f32 %v1250, %v1299
      %v1350 = vadd.f32 %v1253, %v1299
      %v1351 = vadd.f32 %v1256, %v1299
      %v1352 = vadd.f32 %v1259, %v1299
      %v1353 = vadd.f32 %v1262, %v1299
      %v1354 = vadd.f32 %v1265, %v1299
      %v1355 = vadd.f32 %v1268, %v1299
      %v1356 = vadd.f32 %v1271, %v1299
      %v1357 = vadd.f32 %v1274, %v1299
      %v1358 = vadd.f32 %v1277, %v1299
      %v1359 = vadd.f32 %v1280, %v1299
      %v1360 = vadd.f32 %v1283, %v1299
      %v1361 = vadd.f32 %v1286, %v1299
      %v1362 = vadd.f32 %v1289, %v1299
      %v1363 = vadd.f32 %v1292, %v1299
      %v1364 = vadd.f32 %v1295, %v1299
      %v1365 = vmax.f32 %v1301, 0.0
      %v1366 = vmax.f32 %v1302, 0.0
      %v1367 = vmax.f32 %v1303, 0.0
      %v1368 = vmax.f32 %v1304, 0.0
      %v1369 = vmax.f32 %v1305, 0.0
      %v1370 = vmax.f32 %v1306, 0.0
      %v1371 = vmax.f32 %v1307, 0.0
      %v1372 = vmax.f32 %v1308, 0.0
      %v1373 = vmax.f32 %v1309, 0.0
      %v1374 = vmax.f32 %v1310, 0.0
      %v1375 = vmax.f32 %v1311, 0.0
      %v1376 = vmax.f32 %v1312, 0.0
      %v1377 = vmax.f32 %v1313, 0.0
      %v1378 = vmax.f32 %v1314, 0.0
      %v1379 = vmax.f32 %v1315, 0.0
      %v1380 = vmax.f32 %v1316, 0.0
      %v1381 = vmax.f32 %v1317, 0.0
      %v1382 = vmax.f32 %v1318, 0.0
      %v1383 = vmax.f32 %v1319, 0.0
      %v1384 = vmax.f32 %v1320, 0.0
      %v1385 = vmax.f32 %v1321, 0.0
      %v1386 = vmax.f32 %v1322, 0.0
      %v1387 = vmax.f32 %v1323, 0.0
      %v1388 = vmax.f32 %v1324, 0.0
      %v1389 = vmax.f32 %v1325, 0.0
      %v1390 = vmax.f32 %v1326, 0.0
      %v1391 = vmax.f32 %v1327, 0.0
      %v1392 = vmax.f32 %v1328, 0.0
      %v1393 = vmax.f32 %v1329, 0.0
      %v1394 = vmax.f32 %v1330, 0.0
      %v1395 = vmax.f32 %v1331, 0.0
      %v1396 = vmax.f32 %v1332, 0.0
      %v1397 = vmax.f32 %v1333, 0.0
      %v1398 = vmax.f32 %v1334, 0.0
      %v1399 = vmax.f32 %v1335, 0.0
      %v1400 = vmax.f32 %v1336, 0.0
      %v1401 = vmax.f32 %v1337, 0.0
      %v1402 = vmax.f32 %v1338, 0.0
      %v1403 = vmax.f32 %v1339, 0.0
      %v1404 = vmax.f32 %v1340, 0.0
      %v1405 = vmax.f32 %v1341, 0.0
      %v1406 = vmax.f32 %v1342, 0.0
      %v1407 = vmax.f32 %v1343, 0.0
      %v1408 = vmax.f32 %v1344, 0.0
      %v1409 = vmax.f32 %v1345, 0.0
      %v1410 = vmax.f32 %v1346, 0.0
      %v1411 = vmax.f32 %v1347, 0.0
      %v1412 = vmax.f32 %v1348, 0.0
      %v1413 = vmax.f32 %v1349, 0.0
      %v1414 = vmax.f32 %v1350, 0.0
      %v1415 = vmax.f32 %v1351, 0.0
      %v1416 = vmax.f32 %v1352, 0.0
      %v1417 = vmax.f32 %v1353, 0.0
      %v1418 = vmax.f32 %v1354, 0.0
      %v1419 = vmax.f32 %v1355, 0.0
      %v1420 = vmax.f32 %v1356, 0.0
      %v1421 = vmax.f32 %v1357, 0.0
      %v1422 = vmax.f32 %v1358, 0.0
      %v1423 = vmax.f32 %v1359, 0.0
      %v1424 = vmax.f32 %v1360, 0.0
      %v1425 = vmax.f32 %v1361, 0.0
      %v1426 = vmax.f32 %v1362, 0.0
      %v1427 = vmax.f32 %v1363, 0.0
      %v1428 = vmax.f32 %v1364, 0.0
      %v1429 = vld [vmem:[%s5] sm:$0xff]
      %v1430 = vld [vmem:[%s5 + $0x8] sm:$0xff]
      %v1431 = vld [vmem:[%s5 + $0x10] sm:$0xff]
      %v1432 = vld [vmem:[%s5 + $0x18] sm:$0xff]
      %v1433 = vld [vmem:[%s5 + $0x20] sm:$0xff]
      %v1434 = vld [vmem:[%s5 + $0x28] sm:$0xff]
      %v1435 = vld [vmem:[%s5 + $0x30] sm:$0xff]
      %v1436 = vld [vmem:[%s5 + $0x38] sm:$0xff]
      %v1437 = vld [vmem:[%s5 + $0x40] sm:$0xff]
      %v1438 = vld [vmem:[%s5 + $0x48] sm:$0xff]
      %v1439 = vld [vmem:[%s5 + $0x50] sm:$0xff]
      %v1440 = vld [vmem:[%s5 + $0x58] sm:$0xff]
      %v1441 = vld [vmem:[%s5 + $0x60] sm:$0xff]
      %v1442 = vld [vmem:[%s5 + $0x68] sm:$0xff]
      %v1443 = vld [vmem:[%s5 + $0x70] sm:$0xff]
      %v1444 = vld [vmem:[%s5 + $0x78] sm:$0xff]
      %v1445 = vld [vmem:[%s6] sm:$0x1]
      %v1447 = vperm.slane %v1445, 0
      %1449 = vmatpush.msra.mxu0 %v1444
      %1450 = vmatpush.msra.mxu0 %v1443
      %1451 = vmatpush.msra.mxu0 %v1442
      %1452 = vmatpush.msra.mxu0 %v1441
      %1453 = vmatpush.msra.mxu0 %v1440
      %1454 = vmatpush.msra.mxu0 %v1439
      %1455 = vmatpush.msra.mxu0 %v1438
      %1456 = vmatpush.msra.mxu0 %v1437
      %1457 = vmatpush.msra.mxu0 %v1436
      %1458 = vmatpush.msra.mxu0 %v1435
      %1459 = vmatpush.msra.mxu0 %v1434
      %1460 = vmatpush.msra.mxu0 %v1433
      %1461 = vmatpush.msra.mxu0 %v1432
      %1462 = vmatpush.msra.mxu0 %v1431
      %1463 = vmatpush.msra.mxu0 %v1430
      %1464 = vmatpush.msra.mxu0 %v1429
      %1465 = vmatmul.f32.gmra.mxu0 %v1365
      %v1466 = vpop.f32.mrf.mxu0
      %v1467 = vadd.f32 %v1447, %v1466
      %1468 = vmatmul.f32.gmra.mxu0 %v1366
      %v1469 = vpop.f32.mrf.mxu0
      %v1470 = vadd.f32 %v1447, %v1469
      %1471 = vmatmul.f32.gmra.mxu0 %v1367
      %v1472 = vpop.f32.mrf.mxu0
      %v1473 = vadd.f32 %v1447, %v1472
      %1474 = vmatmul.f32.gmra.mxu0 %v1368
      %v1475 = vpop.f32.mrf.mxu0
      %v1476 = vadd.f32 %v1447, %v1475
      %1477 = vmatmul.f32.gmra.mxu0 %v1369
      %v1478 = vpop.f32.mrf.mxu0
      %v1479 = vadd.f32 %v1447, %v1478
      %1480 = vmatmul.f32.gmra.mxu0 %v1370
      %v1481 = vpop.f32.mrf.mxu0
      %v1482 = vadd.f32 %v1447, %v1481
      %1483 = vmatmul.f32.gmra.mxu0 %v1371
      %v1484 = vpop.f32.mrf.mxu0
      %v1485 = vadd.f32 %v1447, %v1484
      %1486 = vmatmul.f32.gmra.mxu0 %v1372
      %v1487 = vpop.f32.mrf.mxu0
      %v1488 = vadd.f32 %v1447, %v1487
      %1489 = vmatmul.f32.gmra.mxu0 %v1373
      %v1490 = vpop.f32.mrf.mxu0
      %v1491 = vadd.f32 %v1447, %v1490
      %1492 = vmatmul.f32.gmra.mxu0 %v1374
      %v1493 = vpop.f32.mrf.mxu0
      %v1494 = vadd.f32 %v1447, %v1493
      %1495 = vmatmul.f32.gmra.mxu0 %v1375
      %v1496 = vpop.f32.mrf.mxu0
      %v1497 = vadd.f32 %v1447, %v1496
      %1498 = vmatmul.f32.gmra.mxu0 %v1376
      %v1499 = vpop.f32.mrf.mxu0
      %v1500 = vadd.f32 %v1447, %v1499
      %1501 = vmatmul.f32.gmra.mxu0 %v1377
      %v1502 = vpop.f32.mrf.mxu0
      %v1503 = vadd.f32 %v1447, %v1502
      %1504 = vmatmul.f32.gmra.mxu0 %v1378
      %v1505 = vpop.f32.mrf.mxu0
      %v1506 = vadd.f32 %v1447, %v1505
      %1507 = vmatmul.f32.gmra.mxu0 %v1379
      %v1508 = vpop.f32.mrf.mxu0
      %v1509 = vadd.f32 %v1447, %v1508
      %1510 = vmatmul.f32.gmra.mxu0 %v1380
      %v1511 = vpop.f32.mrf.mxu0
      %v1512 = vadd.f32 %v1447, %v1511
      %1513 = vmatmul.f32.gmra.mxu0 %v1381
      %v1514 = vpop.f32.mrf.mxu0
      %v1515 = vadd.f32 %v1447, %v1514
      %1516 = vmatmul.f32.gmra.mxu0 %v1382
      %v1517 = vpop.f32.mrf.mxu0
      %v1518 = vadd.f32 %v1447, %v1517
      %1519 = vmatmul.f32.gmra.mxu0 %v1383
      %v1520 = vpop.f32.mrf.mxu0
      %v1521 = vadd.f32 %v1447, %v1520
      %1522 = vmatmul.f32.gmra.mxu0 %v1384
      %v1523 = vpop.f32.mrf.mxu0
      %v1524 = vadd.f32 %v1447, %v1523
      %1525 = vmatmul.f32.gmra.mxu0 %v1385
      %v1526 = vpop.f32.mrf.mxu0
      %v1527 = vadd.f32 %v1447, %v1526
      %1528 = vmatmul.f32.gmra.mxu0 %v1386
      %v1529 = vpop.f32.mrf.mxu0
      %v1530 = vadd.f32 %v1447, %v1529
      %1531 = vmatmul.f32.gmra.mxu0 %v1387
      %v1532 = vpop.f32.mrf.mxu0
      %v1533 = vadd.f32 %v1447, %v1532
      %1534 = vmatmul.f32.gmra.mxu0 %v1388
      %v1535 = vpop.f32.mrf.mxu0
      %v1536 = vadd.f32 %v1447, %v1535
      %1537 = vmatmul.f32.gmra.mxu0 %v1389
      %v1538 = vpop.f32.mrf.mxu0
      %v1539 = vadd.f32 %v1447, %v1538
      %1540 = vmatmul.f32.gmra.mxu0 %v1390
      %v1541 = vpop.f32.mrf.mxu0
      %v1542 = vadd.f32 %v1447, %v1541
      %1543 = vmatmul.f32.gmra.mxu0 %v1391
      %v1544 = vpop.f32.mrf.mxu0
      %v1545 = vadd.f32 %v1447, %v1544
      %1546 = vmatmul.f32.gmra.mxu0 %v1392
      %v1547 = vpop.f32.mrf.mxu0
      %v1548 = vadd.f32 %v1447, %v1547
      %1549 = vmatmul.f32.gmra.mxu0 %v1393
      %v1550 = vpop.f32.mrf.mxu0
      %v1551 = vadd.f32 %v1447, %v1550
      %1552 = vmatmul.f32.gmra.mxu0 %v1394
      %v1553 = vpop.f32.mrf.mxu0
      %v1554 = vadd.f32 %v1447, %v1553
      %1555 = vmatmul.f32.gmra.mxu0 %v1395
      %v1556 = vpop.f32.mrf.mxu0
      %v1557 = vadd.f32 %v1447, %v1556
      %1558 = vmatmul.f32.gmra.mxu0 %v1396
      %v1559 = vpop.f32.mrf.mxu0
      %v1560 = vadd.f32 %v1447, %v1559
      %1561 = vmatmul.f32.gmra.mxu0 %v1397
      %v1562 = vpop.f32.mrf.mxu0
      %v1563 = vadd.f32 %v1447, %v1562
      %1564 = vmatmul.f32.gmra.mxu0 %v1398
      %v1565 = vpop.f32.mrf.mxu0
      %v1566 = vadd.f32 %v1447, %v1565
      %1567 = vmatmul.f32.gmra.mxu0 %v1399
      %v1568 = vpop.f32.mrf.mxu0
      %v1569 = vadd.f32 %v1447, %v1568
      %1570 = vmatmul.f32.gmra.mxu0 %v1400
      %v1571 = vpop.f32.mrf.mxu0
      %v1572 = vadd.f32 %v1447, %v1571
      %1573 = vmatmul.f32.gmra.mxu0 %v1401
      %v1574 = vpop.f32.mrf.mxu0
      %v1575 = vadd.f32 %v1447, %v1574
      %1576 = vmatmul.f32.gmra.mxu0 %v1402
      %v1577 = vpop.f32.mrf.mxu0
      %v1578 = vadd.f32 %v1447, %v1577
      %1579 = vmatmul.f32.gmra.mxu0 %v1403
      %v1580 = vpop.f32.mrf.mxu0
      %v1581 = vadd.f32 %v1447, %v1580
      %1582 = vmatmul.f32.gmra.mxu0 %v1404
      %v1583 = vpop.f32.mrf.mxu0
      %v1584 = vadd.f32 %v1447, %v1583
      %1585 = vmatmul.f32.gmra.mxu0 %v1405
      %v1586 = vpop.f32.mrf.mxu0
      %v1587 = vadd.f32 %v1447, %v1586
      %1588 = vmatmul.f32.gmra.mxu0 %v1406
      %v1589 = vpop.f32.mrf.mxu0
      %v1590 = vadd.f32 %v1447, %v1589
      %1591 = vmatmul.f32.gmra.mxu0 %v1407
      %v1592 = vpop.f32.mrf.mxu0
      %v1593 = vadd.f32 %v1447, %v1592
      %1594 = vmatmul.f32.gmra.mxu0 %v1408
      %v1595 = vpop.f32.mrf.mxu0
      %v1596 = vadd.f32 %v1447, %v1595
      %1597 = vmatmul.f32.gmra.mxu0 %v1409
      %v1598 = vpop.f32.mrf.mxu0
      %v1599 = vadd.f32 %v1447, %v1598
      %1600 = vmatmul.f32.gmra.mxu0 %v1410
      %v1601 = vpop.f32.mrf.mxu0
      %v1602 = vadd.f32 %v1447, %v1601
      %1603 = vmatmul.f32.gmra.mxu0 %v1411
      %v1604 = vpop.f32.mrf.mxu0
      %v1605 = vadd.f32 %v1447, %v1604
      %1606 = vmatmul.f32.gmra.mxu0 %v1412
      %v1607 = vpop.f32.mrf.mxu0
      %v1608 = vadd.f32 %v1447, %v1607
      %1609 = vmatmul.f32.gmra.mxu0 %v1413
      %v1610 = vpop.f32.mrf.mxu0
      %v1611 = vadd.f32 %v1447, %v1610
      %1612 = vmatmul.f32.gmra.mxu0 %v1414
      %v1613 = vpop.f32.mrf.mxu0
      %v1614 = vadd.f32 %v1447, %v1613
      %1615 = vmatmul.f32.gmra.mxu0 %v1415
      %v1616 = vpop.f32.mrf.mxu0
      %v1617 = vadd.f32 %v1447, %v1616
      %1618 = vmatmul.f32.gmra.mxu0 %v1416
      %v1619 = vpop.f32.mrf.mxu0
      %v1620 = vadd.f32 %v1447, %v1619
      %1621 = vmatmul.f32.gmra.mxu0 %v1417
      %v1622 = vpop.f32.mrf.mxu0
      %v1623 = vadd.f32 %v1447, %v1622
      %1624 = vmatmul.f32.gmra.mxu0 %v1418
      %v1625 = vpop.f32.mrf.mxu0
      %v1626 = vadd.f32 %v1447, %v1625
      %1627 = vmatmul.f32.gmra.mxu0 %v1419
      %v1628 = vpop.f32.mrf.mxu0
      %v1629 = vadd.f32 %v1447, %v1628
      %1630 = vmatmul.f32.gmra.mxu0 %v1420
      %v1631 = vpop.f32.mrf.mxu0
      %v1632 = vadd.f32 %v1447, %v1631
      %1633 = vmatmul.f32.gmra.mxu0 %v1421
      %v1634 = vpop.f32.mrf.mxu0
      %v1635 = vadd.f32 %v1447, %v1634
      %1636 = vmatmul.f32.gmra.mxu0 %v1422
      %v1637 = vpop.f32.mrf.mxu0
      %v1638 = vadd.f32 %v1447, %v1637
      %1639 = vmatmul.f32.gmra.mxu0 %v1423
      %v1640 = vpop.f32.mrf.mxu0
      %v1641 = vadd.f32 %v1447, %v1640
      %1642 = vmatmul.f32.gmra.mxu0 %v1424
      %v1643 = vpop.f32.mrf.mxu0
      %v1644 = vadd.f32 %v1447, %v1643
      %1645 = vmatmul.f32.gmra.mxu0 %v1425
      %v1646 = vpop.f32.mrf.mxu0
      %v1647 = vadd.f32 %v1447, %v1646
      %1648 = vmatmul.f32.gmra.mxu0 %v1426
      %v1649 = vpop.f32.mrf.mxu0
      %v1650 = vadd.f32 %v1447, %v1649
      %1651 = vmatmul.f32.gmra.mxu0 %v1427
      %v1652 = vpop.f32.mrf.mxu0
      %v1653 = vadd.f32 %v1447, %v1652
      %1654 = vmatmul.f32.gmra.mxu0 %v1428
      %v1655 = vpop.f32.mrf.mxu0
      %v1656 = vadd.f32 %v1447, %v1655
      %1657 = vdwg.mxu0
      %v1658 = vmax.f32 %v1467, 0.0
      %v1659 = vmax.f32 %v1470, 0.0
      %v1660 = vmax.f32 %v1473, 0.0
      %v1661 = vmax.f32 %v1476, 0.0
      %v1662 = vmax.f32 %v1479, 0.0
      %v1663 = vmax.f32 %v1482, 0.0
      %v1664 = vmax.f32 %v1485, 0.0
      %v1665 = vmax.f32 %v1488, 0.0
      %v1666 = vmax.f32 %v1491, 0.0
      %v1667 = vmax.f32 %v1494, 0.0
      %v1668 = vmax.f32 %v1497, 0.0
      %v1669 = vmax.f32 %v1500, 0.0
      %v1670 = vmax.f32 %v1503, 0.0
      %v1671 = vmax.f32 %v1506, 0.0
      %v1672 = vmax.f32 %v1509, 0.0
      %v1673 = vmax.f32 %v1512, 0.0
      %v1674 = vmax.f32 %v1515, 0.0
      %v1675 = vmax.f32 %v1518, 0.0
      %v1676 = vmax.f32 %v1521, 0.0
      %v1677 = vmax.f32 %v1524, 0.0
      %v1678 = vmax.f32 %v1527, 0.0
      %v1679 = vmax.f32 %v1530, 0.0
      %v1680 = vmax.f32 %v1533, 0.0
      %v1681 = vmax.f32 %v1536, 0.0
      %v1682 = vmax.f32 %v1539, 0.0
      %v1683 = vmax.f32 %v1542, 0.0
      %v1684 = vmax.f32 %v1545, 0.0
      %v1685 = vmax.f32 %v1548, 0.0
      %v1686 = vmax.f32 %v1551, 0.0
      %v1687 = vmax.f32 %v1554, 0.0
      %v1688 = vmax.f32 %v1557, 0.0
      %v1689 = vmax.f32 %v1560, 0.0
      %v1690 = vmax.f32 %v1563, 0.0
      %v1691 = vmax.f32 %v1566, 0.0
      %v1692 = vmax.f32 %v1569, 0.0
      %v1693 = vmax.f32 %v1572, 0.0
      %v1694 = vmax.f32 %v1575, 0.0
      %v1695 = vmax.f32 %v1578, 0.0
      %v1696 = vmax.f32 %v1581, 0.0
      %v1697 = vmax.f32 %v1584, 0.0
      %v1698 = vmax.f32 %v1587, 0.0
      %v1699 = vmax.f32 %v1590, 0.0
      %v1700 = vmax.f32 %v1593, 0.0
      %v1701 = vmax.f32 %v1596, 0.0
      %v1702 = vmax.f32 %v1599, 0.0
      %v1703 = vmax.f32 %v1602, 0.0
      %v1704 = vmax.f32 %v1605, 0.0
      %v1705 = vmax.f32 %v1608, 0.0
      %v1706 = vmax.f32 %v1611, 0.0
      %v1707 = vmax.f32 %v1614, 0.0
      %v1708 = vmax.f32 %v1617, 0.0
      %v1709 = vmax.f32 %v1620, 0.0
      %v1710 = vmax.f32 %v1623, 0.0
      %v1711 = vmax.f32 %v1626, 0.0
      %v1712 = vmax.f32 %v1629, 0.0
      %v1713 = vmax.f32 %v1632, 0.0
      %v1714 = vmax.f32 %v1635, 0.0
      %v1715 = vmax.f32 %v1638, 0.0
      %v1716 = vmax.f32 %v1641, 0.0
      %v1717 = vmax.f32 %v1644, 0.0
      %v1718 = vmax.f32 %v1647, 0.0
      %v1719 = vmax.f32 %v1650, 0.0
      %v1720 = vmax.f32 %v1653, 0.0
      %v1721 = vmax.f32 %v1656, 0.0
      %v1722 = vld [vmem:[%s7] sm:$0x1]
      %v1724 = vperm.slane %v1722, 0
      %v1726 = vmul.f32 %v1658, %v1724
      %v1727 = vmul.f32 %v1659, %v1724
      %v1728 = vmul.f32 %v1660, %v1724
      %v1729 = vmul.f32 %v1661, %v1724
      %v1730 = vmul.f32 %v1662, %v1724
      %v1731 = vmul.f32 %v1663, %v1724
      %v1732 = vmul.f32 %v1664, %v1724
      %v1733 = vmul.f32 %v1665, %v1724
      %v1734 = vmul.f32 %v1666, %v1724
      %v1735 = vmul.f32 %v1667, %v1724
      %v1736 = vmul.f32 %v1668, %v1724
      %v1737 = vmul.f32 %v1669, %v1724
      %v1738 = vmul.f32 %v1670, %v1724
      %v1739 = vmul.f32 %v1671, %v1724
      %v1740 = vmul.f32 %v1672, %v1724
      %v1741 = vmul.f32 %v1673, %v1724
      %v1742 = vmul.f32 %v1674, %v1724
      %v1743 = vmul.f32 %v1675, %v1724
      %v1744 = vmul.f32 %v1676, %v1724
      %v1745 = vmul.f32 %v1677, %v1724
      %v1746 = vmul.f32 %v1678, %v1724
      %v1747 = vmul.f32 %v1679, %v1724
      %v1748 = vmul.f32 %v1680, %v1724
      %v1749 = vmul.f32 %v1681, %v1724
      %v1750 = vmul.f32 %v1682, %v1724
      %v1751 = vmul.f32 %v1683, %v1724
      %v1752 = vmul.f32 %v1684, %v1724
      %v1753 = vmul.f32 %v1685, %v1724
      %v1754 = vmul.f32 %v1686, %v1724
      %v1755 = vmul.f32 %v1687, %v1724
      %v1756 = vmul.f32 %v1688, %v1724
      %v1757 = vmul.f32 %v1689, %v1724
      %v1758 = vmul.f32 %v1690, %v1724
      %v1759 = vmul.f32 %v1691, %v1724
      %v1760 = vmul.f32 %v1692, %v1724
      %v1761 = vmul.f32 %v1693, %v1724
      %v1762 = vmul.f32 %v1694, %v1724
      %v1763 = vmul.f32 %v1695, %v1724
      %v1764 = vmul.f32 %v1696, %v1724
      %v1765 = vmul.f32 %v1697, %v1724
      %v1766 = vmul.f32 %v1698, %v1724
      %v1767 = vmul.f32 %v1699, %v1724
      %v1768 = vmul.f32 %v1700, %v1724
      %v1769 = vmul.f32 %v1701, %v1724
      %v1770 = vmul.f32 %v1702, %v1724
      %v1771 = vmul.f32 %v1703, %v1724
      %v1772 = vmul.f32 %v1704, %v1724
      %v1773 = vmul.f32 %v1705, %v1724
      %v1774 = vmul.f32 %v1706, %v1724
      %v1775 = vmul.f32 %v1707, %v1724
      %v1776 = vmul.f32 %v1708, %v1724
      %v1777 = vmul.f32 %v1709, %v1724
      %v1778 = vmul.f32 %v1710, %v1724
      %v1779 = vmul.f32 %v1711, %v1724
      %v1780 = vmul.f32 %v1712, %v1724
      %v1781 = vmul.f32 %v1713, %v1724
      %v1782 = vmul.f32 %v1714, %v1724
      %v1783 = vmul.f32 %v1715, %v1724
      %v1784 = vmul.f32 %v1716, %v1724
      %v1785 = vmul.f32 %v1717, %v1724
      %v1786 = vmul.f32 %v1718, %v1724
      %v1787 = vmul.f32 %v1719, %v1724
      %v1788 = vmul.f32 %v1720, %v1724
      %v1789 = vmul.f32 %v1721, %v1724
      %1790 = vadd.xlane.f32.xlu0 %v1726
      %v1791 = vpop.xlane.xlu0 %1790
      %1792 = vadd.xlane.f32.xlu0 %v1727
      %v1793 = vpop.xlane.xlu0 %1792
      %1794 = vadd.xlane.f32.xlu0 %v1728
      %v1795 = vpop.xlane.xlu0 %1794
      %1796 = vadd.xlane.f32.xlu0 %v1729
      %v1797 = vpop.xlane.xlu0 %1796
      %1798 = vadd.xlane.f32.xlu0 %v1730
      %v1799 = vpop.xlane.xlu0 %1798
      %1800 = vadd.xlane.f32.xlu0 %v1731
      %v1801 = vpop.xlane.xlu0 %1800
      %1802 = vadd.xlane.f32.xlu0 %v1732
      %v1803 = vpop.xlane.xlu0 %1802
      %1804 = vadd.xlane.f32.xlu0 %v1733
      %v1805 = vpop.xlane.xlu0 %1804
      %1806 = vadd.xlane.f32.xlu0 %v1734
      %v1807 = vpop.xlane.xlu0 %1806
      %1808 = vadd.xlane.f32.xlu0 %v1735
      %v1809 = vpop.xlane.xlu0 %1808
      %1810 = vadd.xlane.f32.xlu0 %v1736
      %v1811 = vpop.xlane.xlu0 %1810
      %1812 = vadd.xlane.f32.xlu0 %v1737
      %v1813 = vpop.xlane.xlu0 %1812
      %1814 = vadd.xlane.f32.xlu0 %v1738
      %v1815 = vpop.xlane.xlu0 %1814
      %1816 = vadd.xlane.f32.xlu0 %v1739
      %v1817 = vpop.xlane.xlu0 %1816
      %1818 = vadd.xlane.f32.xlu0 %v1740
      %v1819 = vpop.xlane.xlu0 %1818
      %1820 = vadd.xlane.f32.xlu0 %v1741
      %v1821 = vpop.xlane.xlu0 %1820
      %1822 = vadd.xlane.f32.xlu0 %v1742
      %v1823 = vpop.xlane.xlu0 %1822
      %1824 = vadd.xlane.f32.xlu0 %v1743
      %v1825 = vpop.xlane.xlu0 %1824
      %1826 = vadd.xlane.f32.xlu0 %v1744
      %v1827 = vpop.xlane.xlu0 %1826
      %1828 = vadd.xlane.f32.xlu0 %v1745
      %v1829 = vpop.xlane.xlu0 %1828
      %1830 = vadd.xlane.f32.xlu0 %v1746
      %v1831 = vpop.xlane.xlu0 %1830
      %1832 = vadd.xlane.f32.xlu0 %v1747
      %v1833 = vpop.xlane.xlu0 %1832
      %1834 = vadd.xlane.f32.xlu0 %v1748
      %v1835 = vpop.xlane.xlu0 %1834
      %1836 = vadd.xlane.f32.xlu0 %v1749
      %v1837 = vpop.xlane.xlu0 %1836
      %1838 = vadd.xlane.f32.xlu0 %v1750
      %v1839 = vpop.xlane.xlu0 %1838
      %1840 = vadd.xlane.f32.xlu0 %v1751
      %v1841 = vpop.xlane.xlu0 %1840
      %1842 = vadd.xlane.f32.xlu0 %v1752
      %v1843 = vpop.xlane.xlu0 %1842
      %1844 = vadd.xlane.f32.xlu0 %v1753
      %v1845 = vpop.xlane.xlu0 %1844
      %1846 = vadd.xlane.f32.xlu0 %v1754
      %v1847 = vpop.xlane.xlu0 %1846
      %1848 = vadd.xlane.f32.xlu0 %v1755
      %v1849 = vpop.xlane.xlu0 %1848
      %1850 = vadd.xlane.f32.xlu0 %v1756
      %v1851 = vpop.xlane.xlu0 %1850
      %1852 = vadd.xlane.f32.xlu0 %v1757
      %v1853 = vpop.xlane.xlu0 %1852
      %1854 = vadd.xlane.f32.xlu0 %v1758
      %v1855 = vpop.xlane.xlu0 %1854
      %1856 = vadd.xlane.f32.xlu0 %v1759
      %v1857 = vpop.xlane.xlu0 %1856
      %1858 = vadd.xlane.f32.xlu0 %v1760
      %v1859 = vpop.xlane.xlu0 %1858
      %1860 = vadd.xlane.f32.xlu0 %v1761
      %v1861 = vpop.xlane.xlu0 %1860
      %1862 = vadd.xlane.f32.xlu0 %v1762
      %v1863 = vpop.xlane.xlu0 %1862
      %1864 = vadd.xlane.f32.xlu0 %v1763
      %v1865 = vpop.xlane.xlu0 %1864
      %1866 = vadd.xlane.f32.xlu0 %v1764
      %v1867 = vpop.xlane.xlu0 %1866
      %1868 = vadd.xlane.f32.xlu0 %v1765
      %v1869 = vpop.xlane.xlu0 %1868
      %1870 = vadd.xlane.f32.xlu0 %v1766
      %v1871 = vpop.xlane.xlu0 %1870
      %1872 = vadd.xlane.f32.xlu0 %v1767
      %v1873 = vpop.xlane.xlu0 %1872
      %1874 = vadd.xlane.f32.xlu0 %v1768
      %v1875 = vpop.xlane.xlu0 %1874
      %1876 = vadd.xlane.f32.xlu0 %v1769
      %v1877 = vpop.xlane.xlu0 %1876
      %1878 = vadd.xlane.f32.xlu0 %v1770
      %v1879 = vpop.xlane.xlu0 %1878
      %1880 = vadd.xlane.f32.xlu0 %v1771
      %v1881 = vpop.xlane.xlu0 %1880
      %1882 = vadd.xlane.f32.xlu0 %v1772
      %v1883 = vpop.xlane.xlu0 %1882
      %1884 = vadd.xlane.f32.xlu0 %v1773
      %v1885 = vpop.xlane.xlu0 %1884
      %1886 = vadd.xlane.f32.xlu0 %v1774
      %v1887 = vpop.xlane.xlu0 %1886
      %1888 = vadd.xlane.f32.xlu0 %v1775
      %v1889 = vpop.xlane.xlu0 %1888
      %1890 = vadd.xlane.f32.xlu0 %v1776
      %v1891 = vpop.xlane.xlu0 %1890
      %1892 = vadd.xlane.f32.xlu0 %v1777
      %v1893 = vpop.xlane.xlu0 %1892
      %1894 = vadd.xlane.f32.xlu0 %v1778
      %v1895 = vpop.xlane.xlu0 %1894
      %1896 = vadd.xlane.f32.xlu0 %v1779
      %v1897 = vpop.xlane.xlu0 %1896
      %1898 = vadd.xlane.f32.xlu0 %v1780
      %v1899 = vpop.xlane.xlu0 %1898
      %1900 = vadd.xlane.f32.xlu0 %v1781
      %v1901 = vpop.xlane.xlu0 %1900
      %1902 = vadd.xlane.f32.xlu0 %v1782
      %v1903 = vpop.xlane.xlu0 %1902
      %1904 = vadd.xlane.f32.xlu0 %v1783
      %v1905 = vpop.xlane.xlu0 %1904
      %1906 = vadd.xlane.f32.xlu0 %v1784
      %v1907 = vpop.xlane.xlu0 %1906
      %1908 = vadd.xlane.f32.xlu0 %v1785
      %v1909 = vpop.xlane.xlu0 %1908
      %1910 = vadd.xlane.f32.xlu0 %v1786
      %v1911 = vpop.xlane.xlu0 %1910
      %1912 = vadd.xlane.f32.xlu0 %v1787
      %v1913 = vpop.xlane.xlu0 %1912
      %1914 = vadd.xlane.f32.xlu0 %v1788
      %v1915 = vpop.xlane.xlu0 %1914
      %1916 = vadd.xlane.f32.xlu0 %v1789
      %v1917 = vpop.xlane.xlu0 %1916
      %s1918 = sld [smem:[#allocation2]]
      %v1919 = vstv %s1918
      %v1920 = vadd.f32 %v1791, %v1919
      %v1921 = vadd.f32 %v1793, %v1919
      %v1922 = vadd.f32 %v1795, %v1919
      %v1923 = vadd.f32 %v1797, %v1919
      %v1924 = vadd.f32 %v1799, %v1919
      %v1925 = vadd.f32 %v1801, %v1919
      %v1926 = vadd.f32 %v1803, %v1919
      %v1927 = vadd.f32 %v1805, %v1919
      %v1928 = vadd.f32 %v1807, %v1919
      %v1929 = vadd.f32 %v1809, %v1919
      %v1930 = vadd.f32 %v1811, %v1919
      %v1931 = vadd.f32 %v1813, %v1919
      %v1932 = vadd.f32 %v1815, %v1919
      %v1933 = vadd.f32 %v1817, %v1919
      %v1934 = vadd.f32 %v1819, %v1919
      %v1935 = vadd.f32 %v1821, %v1919
      %v1936 = vadd.f32 %v1823, %v1919
      %v1937 = vadd.f32 %v1825, %v1919
      %v1938 = vadd.f32 %v1827, %v1919
      %v1939 = vadd.f32 %v1829, %v1919
      %v1940 = vadd.f32 %v1831, %v1919
      %v1941 = vadd.f32 %v1833, %v1919
      %v1942 = vadd.f32 %v1835, %v1919
      %v1943 = vadd.f32 %v1837, %v1919
      %v1944 = vadd.f32 %v1839, %v1919
      %v1945 = vadd.f32 %v1841, %v1919
      %v1946 = vadd.f32 %v1843, %v1919
      %v1947 = vadd.f32 %v1845, %v1919
      %v1948 = vadd.f32 %v1847, %v1919
      %v1949 = vadd.f32 %v1849, %v1919
      %v1950 = vadd.f32 %v1851, %v1919
      %v1951 = vadd.f32 %v1853, %v1919
      %v1952 = vadd.f32 %v1855, %v1919
      %v1953 = vadd.f32 %v1857, %v1919
      %v1954 = vadd.f32 %v1859, %v1919
      %v1955 = vadd.f32 %v1861, %v1919
      %v1956 = vadd.f32 %v1863, %v1919
      %v1957 = vadd.f32 %v1865, %v1919
      %v1958 = vadd.f32 %v1867, %v1919
      %v1959 = vadd.f32 %v1869, %v1919
      %v1960 = vadd.f32 %v1871, %v1919
      %v1961 = vadd.f32 %v1873, %v1919
      %v1962 = vadd.f32 %v1875, %v1919
      %v1963 = vadd.f32 %v1877, %v1919
      %v1964 = vadd.f32 %v1879, %v1919
      %v1965 = vadd.f32 %v1881, %v1919
      %v1966 = vadd.f32 %v1883, %v1919
      %v1967 = vadd.f32 %v1885, %v1919
      %v1968 = vadd.f32 %v1887, %v1919
      %v1969 = vadd.f32 %v1889, %v1919
      %v1970 = vadd.f32 %v1891, %v1919
      %v1971 = vadd.f32 %v1893, %v1919
      %v1972 = vadd.f32 %v1895, %v1919
      %v1973 = vadd.f32 %v1897, %v1919
      %v1974 = vadd.f32 %v1899, %v1919
      %v1975 = vadd.f32 %v1901, %v1919
      %v1976 = vadd.f32 %v1903, %v1919
      %v1977 = vadd.f32 %v1905, %v1919
      %v1978 = vadd.f32 %v1907, %v1919
      %v1979 = vadd.f32 %v1909, %v1919
      %v1980 = vadd.f32 %v1911, %v1919
      %v1981 = vadd.f32 %v1913, %v1919
      %v1982 = vadd.f32 %v1915, %v1919
      %v1983 = vadd.f32 %v1917, %v1919
      %vm1984 = vcmask 7168
      %1985 = vst.msk [vmem:[%s357] sm:$0xff] %vm1984, %v1920
      %1986 = vst.msk [vmem:[%s357 + $0x8] sm:$0xff] %vm1984, %v1921
      %1987 = vst.msk [vmem:[%s357 + $0x10] sm:$0xff] %vm1984, %v1922
      %1988 = vst.msk [vmem:[%s357 + $0x18] sm:$0xff] %vm1984, %v1923
      %1989 = vst.msk [vmem:[%s357 + $0x20] sm:$0xff] %vm1984, %v1924
      %1990 = vst.msk [vmem:[%s357 + $0x28] sm:$0xff] %vm1984, %v1925
      %1991 = vst.msk [vmem:[%s357 + $0x30] sm:$0xff] %vm1984, %v1926
      %1992 = vst.msk [vmem:[%s357 + $0x38] sm:$0xff] %vm1984, %v1927
      %1993 = vst.msk [vmem:[%s357 + $0x40] sm:$0xff] %vm1984, %v1928
      %1994 = vst.msk [vmem:[%s357 + $0x48] sm:$0xff] %vm1984, %v1929
      %1995 = vst.msk [vmem:[%s357 + $0x50] sm:$0xff] %vm1984, %v1930
      %1996 = vst.msk [vmem:[%s357 + $0x58] sm:$0xff] %vm1984, %v1931
      %1997 = vst.msk [vmem:[%s357 + $0x60] sm:$0xff] %vm1984, %v1932
      %1998 = vst.msk [vmem:[%s357 + $0x68] sm:$0xff] %vm1984, %v1933
      %1999 = vst.msk [vmem:[%s357 + $0x70] sm:$0xff] %vm1984, %v1934
      %2000 = vst.msk [vmem:[%s357 + $0x78] sm:$0xff] %vm1984, %v1935
      %2001 = vst.msk [vmem:[%s357 + $0x80] sm:$0xff] %vm1984, %v1936
      %2002 = vst.msk [vmem:[%s357 + $0x88] sm:$0xff] %vm1984, %v1937
      %2003 = vst.msk [vmem:[%s357 + $0x90] sm:$0xff] %vm1984, %v1938
      %2004 = vst.msk [vmem:[%s357 + $0x98] sm:$0xff] %vm1984, %v1939
      %2005 = vst.msk [vmem:[%s357 + $0xa0] sm:$0xff] %vm1984, %v1940
      %2006 = vst.msk [vmem:[%s357 + $0xa8] sm:$0xff] %vm1984, %v1941
      %2007 = vst.msk [vmem:[%s357 + $0xb0] sm:$0xff] %vm1984, %v1942
      %2008 = vst.msk [vmem:[%s357 + $0xb8] sm:$0xff] %vm1984, %v1943
      %2009 = vst.msk [vmem:[%s357 + $0xc0] sm:$0xff] %vm1984, %v1944
      %2010 = vst.msk [vmem:[%s357 + $0xc8] sm:$0xff] %vm1984, %v1945
      %2011 = vst.msk [vmem:[%s357 + $0xd0] sm:$0xff] %vm1984, %v1946
      %2012 = vst.msk [vmem:[%s357 + $0xd8] sm:$0xff] %vm1984, %v1947
      %2013 = vst.msk [vmem:[%s357 + $0xe0] sm:$0xff] %vm1984, %v1948
      %2014 = vst.msk [vmem:[%s357 + $0xe8] sm:$0xff] %vm1984, %v1949
      %2015 = vst.msk [vmem:[%s357 + $0xf0] sm:$0xff] %vm1984, %v1950
      %2016 = vst.msk [vmem:[%s357 + $0xf8] sm:$0xff] %vm1984, %v1951
      %2017 = vst.msk [vmem:[%s357 + $0x100] sm:$0xff] %vm1984, %v1952
      %2018 = vst.msk [vmem:[%s357 + $0x108] sm:$0xff] %vm1984, %v1953
      %2019 = vst.msk [vmem:[%s357 + $0x110] sm:$0xff] %vm1984, %v1954
      %2020 = vst.msk [vmem:[%s357 + $0x118] sm:$0xff] %vm1984, %v1955
      %2021 = vst.msk [vmem:[%s357 + $0x120] sm:$0xff] %vm1984, %v1956
      %2022 = vst.msk [vmem:[%s357 + $0x128] sm:$0xff] %vm1984, %v1957
      %2023 = vst.msk [vmem:[%s357 + $0x130] sm:$0xff] %vm1984, %v1958
      %2024 = vst.msk [vmem:[%s357 + $0x138] sm:$0xff] %vm1984, %v1959
      %2025 = vst.msk [vmem:[%s357 + $0x140] sm:$0xff] %vm1984, %v1960
      %2026 = vst.msk [vmem:[%s357 + $0x148] sm:$0xff] %vm1984, %v1961
      %2027 = vst.msk [vmem:[%s357 + $0x150] sm:$0xff] %vm1984, %v1962
      %2028 = vst.msk [vmem:[%s357 + $0x158] sm:$0xff] %vm1984, %v1963
      %2029 = vst.msk [vmem:[%s357 + $0x160] sm:$0xff] %vm1984, %v1964
      %2030 = vst.msk [vmem:[%s357 + $0x168] sm:$0xff] %vm1984, %v1965
      %2031 = vst.msk [vmem:[%s357 + $0x170] sm:$0xff] %vm1984, %v1966
      %2032 = vst.msk [vmem:[%s357 + $0x178] sm:$0xff] %vm1984, %v1967
      %2033 = vst.msk [vmem:[%s357 + $0x180] sm:$0xff] %vm1984, %v1968
      %2034 = vst.msk [vmem:[%s357 + $0x188] sm:$0xff] %vm1984, %v1969
      %2035 = vst.msk [vmem:[%s357 + $0x190] sm:$0xff] %vm1984, %v1970
      %2036 = vst.msk [vmem:[%s357 + $0x198] sm:$0xff] %vm1984, %v1971
      %2037 = vst.msk [vmem:[%s357 + $0x1a0] sm:$0xff] %vm1984, %v1972
      %2038 = vst.msk [vmem:[%s357 + $0x1a8] sm:$0xff] %vm1984, %v1973
      %2039 = vst.msk [vmem:[%s357 + $0x1b0] sm:$0xff] %vm1984, %v1974
      %2040 = vst.msk [vmem:[%s357 + $0x1b8] sm:$0xff] %vm1984, %v1975
      %2041 = vst.msk [vmem:[%s357 + $0x1c0] sm:$0xff] %vm1984, %v1976
      %2042 = vst.msk [vmem:[%s357 + $0x1c8] sm:$0xff] %vm1984, %v1977
      %2043 = vst.msk [vmem:[%s357 + $0x1d0] sm:$0xff] %vm1984, %v1978
      %2044 = vst.msk [vmem:[%s357 + $0x1d8] sm:$0xff] %vm1984, %v1979
      %2045 = vst.msk [vmem:[%s357 + $0x1e0] sm:$0xff] %vm1984, %v1980
      %2046 = vst.msk [vmem:[%s357 + $0x1e8] sm:$0xff] %vm1984, %v1981
      %2047 = vst.msk [vmem:[%s357 + $0x1f0] sm:$0xff] %vm1984, %v1982
      %2048 = vst.msk [vmem:[%s357 + $0x1f8] sm:$0xff] %vm1984, %v1983
      %s2049 = smul.u32 64, %s21
      %p2050 = scmp.lt.s32.totalorder %s2049, 127
      %s2051 = scalar_select %p2050, %s2049, 127
      %s2052 = smul.addr %s2051, 8
      %s2053 = scalar_lea.vmem %s9, %s2052
      // Predicated region
      $region57: #{critic_forward.1} parent=55 // pred_check
        %p2054 = pneg %p238
      $region58: #{critic_forward.1} parent=55 // pred_check_branch
        %2056 = sbr.rel (%p2054) target = $region60
      $region59: #{critic_forward.1} parent=55 // pred_region
        %s2057 = smul.u32 64, %s21
      $region60: #{critic_forward.1} parent=55 // pred_fallthru
        _
    $region56: #{critic_forward.1} parent=5 // pred_fallthru
      _
    %p2058 = scmp.le.s32.totalorder 2, %s16
    // Predicated region
    $region61: #{critic_forward.1} parent=5 // pred_check
      %p2059 = pneg %p2058
    $region62: #{critic_forward.1} parent=5 // pred_check_branch
      %2061 = sbr.rel (%p2059) target = $region64
    $region63: #{critic_forward.1} parent=5 // pred_region
      %s2062 = ssub.s32 %s16, 2
      // Predicated region
      $region65: #{critic_forward.1} parent=63 // pred_check
        %p2063 = pneg %p244
      $region66: #{critic_forward.1} parent=63 // pred_check_branch
        %2065 = sbr.rel (%p2063) target = $region68
      $region67: #{critic_forward.1} parent=63 // pred_region
        %s2066 = smul.u32 64, %s22
        %p2067 = scmp.lt.s32.totalorder %s2066, 127
        %s2068 = scalar_select %p2067, %s2066, 127
        %s2069 = smul.addr %s2068, 8
        %s2070 = scalar_lea.vmem %s9, %s2069
      $region68: #{critic_forward.1} parent=63 // pred_fallthru
        _
    $region64: #{critic_forward.1} parent=5 // pred_fallthru
      _
  $region6: #{critic_forward.1} parent=0 // loop_footer
    %s20 = sadd.s32 1, %s16
  $region7: #{critic_forward.1} parent=0 // loop_footer_branch
    %15 = sbr.rel target = $region3
  $region8: #{critic_forward.1} parent=0 // loop_exit
    _

</llo_original>
